<compile_context>
chip_gen: v5e
topology: v5e:2x2
jax: 0.10.0
libtpu: 0.0.40
codegen_flags: <defaults>
</compile_context>

<pallas_src>
import functools

import jax
import jax.numpy as jnp
from jax.experimental import pallas as pl
from jax.experimental.pallas import tpu as pltpu

EPS = 1e-5
_COL0 = 8  # 8-aligned sublane offset of the valid W range inside the scratch


def _wpad(W):
    # Need columns [_COL0 - 1, _COL0 + W]; keep the scratch width 8-aligned.
    return ((_COL0 + W + 1 + 7) // 8) * 8


def _local_agg_kernel(x_ref, w0_ref, b0_ref, dw_ref, w1_ref, b1_ref, o_ref,
                      ypad_ref, *, img_h, tile_h):
    # x_ref : (H, W, C)   unpadded NHWC image (matmul dtype), resident across h
    # w0_ref: (C, C)      BN0-folded pointwise-conv-0 weight (in x out)
    # b0_ref: (1, C) f32  BN0 shift pushed through pointwise conv 0
    # dw_ref: (9, C) f32  BN1-scale-folded depthwise taps, row = kh*3 + kw
    # w1_ref: (C, C)      pointwise-conv-1 weight (in x out)
    # b1_ref: (1, C) f32  BN1 shift pushed through pointwise conv 1
    # o_ref : (tile_h, W, C)
    # ypad_ref: (tile_h + 2, _wpad(W), C) f32 scratch for the depthwise slab
    H, W, C = x_ref.shape
    th2 = tile_h + 2
    h = pl.program_id(1)
    n_h = pl.num_programs(1)
    r0 = h * tile_h

    w0 = w0_ref[...]
    b0 = b0_ref[...]

    # ---- pointwise conv 0 (BN0 folded in) on the tile rows ----
    # NB: the (tile_h*W, C) merge of leading dims is copy-free when W is a
    # multiple of the sublane tile (8 for f32, 16 for bf16).
    x_tile = x_ref[pl.ds(r0, tile_h)]                       # (tile_h, W, C)
    y_mid = jnp.dot(x_tile.reshape(tile_h * W, C), w0,
                    preferred_element_type=jnp.float32) + b0
    y_mid = y_mid.reshape(tile_h, W, C)

    # Halo rows: pw0 of the single row just above / below the tile.  At the
    # image edges that row is the depthwise zero padding; the 0/1 scalar factor
    # zeroes it (no full-tile masks, the extra 1-row matmul is noise).
    vt = jnp.where(h > 0, 1.0, 0.0)
    vb = jnp.where(h < n_h - 1, 1.0, 0.0)
    top = x_ref[pl.ds(jnp.maximum(r0 - 1, 0), 1)]           # (1, W, C)
    bot = x_ref[pl.ds(jnp.minimum(r0 + tile_h, img_h - 1), 1)]
    y_top = (jnp.dot(top.reshape(W, C), w0,
                     preferred_element_type=jnp.float32) + b0) * vt
    y_bot = (jnp.dot(bot.reshape(W, C), w0,
                     preferred_element_type=jnp.float32) + b0) * vb

    # ---- stage the (tile_h + 2)-row slab into the W-padded f32 scratch ----
    # Valid data at columns [_COL0, _COL0 + W); zero-pad columns at _COL0 - 1
    # and _COL0 + W.  All stores are sublane-aligned (offset 8) and leading-dim
    # addressed; only the kw = 0 / kw = 2 view *loads* below are off-by-one.
    zcol = jnp.zeros((th2, 1, C), jnp.float32)
    ypad_ref[:, pl.ds(_COL0 - 1, 1), :] = zcol
    ypad_ref[:, pl.ds(_COL0 + W, 1), :] = zcol
    ypad_ref[pl.ds(1, tile_h), pl.ds(_COL0, W), :] = y_mid
    ypad_ref[pl.ds(0, 1), pl.ds(_COL0, W), :] = y_top.reshape(1, W, C)
    ypad_ref[pl.ds(th2 - 1, 1), pl.ds(_COL0, W), :] = y_bot.reshape(1, W, C)

    # ---- depthwise 3x3, padding=1, groups=C (BN1 scale folded into taps) ----
    # TODO(synk): pltpu.roll(slab, +-1, axis=1) + a single column mask would
    # move the two off-by-one view realignments onto the XLU entirely.
    acc = jnp.zeros((tile_h, W, C), jnp.float32)
    for kw in range(3):
        slab = ypad_ref[:, pl.ds(_COL0 - 1 + kw, W), :]     # (th2, W, C)
        for kh in range(3):
            acc = acc + slab[kh:kh + tile_h] * dw_ref[kh * 3 + kw]

    # ---- pointwise conv 1 (+ BN1 shift pushed through it) ----
    out = jnp.dot(acc.reshape(tile_h * W, C).astype(w1_ref.dtype), w1_ref[...],
                  preferred_element_type=jnp.float32) + b1_ref[...]
    o_ref[...] = out.reshape(tile_h, W, C).astype(o_ref.dtype)


def _estimate_vmem(H, W, C, tile_h, in_itemsize, w_itemsize, out_itemsize):
    th2 = tile_h + 2
    return int(
        2 * H * W * C * in_itemsize                    # resident image (double-buffered)
        + 2 * tile_h * W * C * out_itemsize            # output tile (double-buffered)
        + 2 * (2 * C * C * w_itemsize + 11 * C * 4)    # weights / taps / biases
        + th2 * _wpad(W) * C * 4                       # ypad scratch
        + 8 * th2 * W * C * 4)                         # headroom for f32 temporaries


def _vmem_budget_bytes():
    cap = 64 * 1024 * 1024                 # v7x per-TensorCore capacity (worst case)
    try:
        cap = int(pltpu.get_tpu_info().vmem_capacity_bytes)
    except Exception:
        pass
    return int(cap * 3 // 4)               # leave headroom for compiler scratch/spill


def _pick_tile_h(H, W, C, in_itemsize, w_itemsize, out_itemsize, budget):
    best = 1
    for t in range(1, H + 1):
        if H % t:
            continue
        if _estimate_vmem(H, W, C, t, in_itemsize, w_itemsize, out_itemsize) <= budget:
            best = t
    # TODO(synk): if even tile_h=1 exceeds the budget (huge H*W*C), fall back
    # to per-tile halo input blocks instead of a fully resident image.
    return best


def local_agg(x_nchw, w0_eff, bias0, dww_eff, w1t, bias1, *,
              tile_h=None, matmul_dtype=jnp.bfloat16):
    N, C, H, W = x_nchw.shape
    out_dtype = x_nchw.dtype
    in_itemsize = jnp.dtype(matmul_dtype).itemsize
    w_itemsize = in_itemsize
    out_itemsize = jnp.dtype(out_dtype).itemsize

    budget = _vmem_budget_bytes()
    if tile_h is None or H % tile_h != 0:
        tile_h = _pick_tile_h(H, W, C, in_itemsize, w_itemsize, out_itemsize, budget)
    n_h = H // tile_h

    # NCHW -> NHWC and cast to the matmul dtype in one XLA pass; no jnp.pad
    # (the H halo is built in-kernel).
    # TODO(synk): CompilerParams(allow_input_fusion=[0]) could fold this
    # transpose+cast into the Pallas input DMA and drop the remaining HBM pass.
    x = jnp.transpose(x_nchw, (0, 2, 3, 1)).astype(matmul_dtype)
    w0_eff = w0_eff.astype(matmul_dtype)
    w1t = w1t.astype(matmul_dtype)
    bias0 = bias0.astype(jnp.float32)
    bias1 = bias1.astype(jnp.float32)
    dww_eff = dww_eff.astype(jnp.float32)

    kernel = functools.partial(_local_agg_kernel, img_h=H, tile_h=tile_h)

    cost = pl.CostEstimate(
        flops=N * (4 * H * W * C * C + 18 * H * W * C),
        transcendentals=0,
        bytes_accessed=(N * H * W * C * (in_itemsize + out_itemsize)
                        + 2 * C * C * w_itemsize + 11 * C * 4))

    vmem_need = _estimate_vmem(H, W, C, tile_h, in_itemsize, w_itemsize, out_itemsize)
    vmem_limit = int(min(max(2 * vmem_need, 32 * 1024 * 1024), budget))

    out_nhwc = pl.pallas_call(
        kernel,
        out_shape=jax.ShapeDtypeStruct((N, H, W, C), out_dtype),
        grid_spec=pltpu.PrefetchScalarGridSpec(
            num_scalar_prefetch=0,
            grid=(N, n_h),
            in_specs=[
                # Full unpadded image; the index map ignores h so the block
                # stays resident in VMEM across the whole h loop for a given n.
                pl.BlockSpec((None, H, W, C), lambda n, h: (n, 0, 0, 0)),
                # Constant weights / params.
                # TODO(synk): pipeline_mode=pl.Buffered(1) on these would drop
                # their redundant second buffer once stable in the target jax.
                pl.BlockSpec((C, C), lambda n, h: (0, 0)),   # pw0 weight (BN0 folded)
                pl.BlockSpec((1, C), lambda n, h: (0, 0)),   # bias0
                pl.BlockSpec((9, C), lambda n, h: (0, 0)),   # depthwise taps * s1
                pl.BlockSpec((C, C), lambda n, h: (0, 0)),   # pw1 weight
                pl.BlockSpec((1, C), lambda n, h: (0, 0)),   # bias1
            ],
            out_specs=pl.BlockSpec((None, tile_h, W, C), lambda n, h: (n, h, 0, 0)),
            scratch_shapes=[pltpu.VMEM((tile_h + 2, _wpad(W), C), jnp.float32)],
        ),
        compiler_params=pltpu.CompilerParams(
            # Only the batch axis is core-split (v7x megacore): splitting h
            # would duplicate the resident image in both cores' VMEM/HBM reads.
            dimension_semantics=("parallel", "arbitrary"),
            vmem_limit_bytes=vmem_limit),
        cost_estimate=cost,
    )(x, w0_eff, bias0, dww_eff, w1t, bias1)

    return jnp.transpose(out_nhwc, (0, 3, 1, 2))            # NHWC -> NCHW


def make_params(key, C):
    ks = jax.random.split(key, 11)
    gamma0 = jax.random.normal(ks[0], (C,), jnp.float32) * 0.1 + 1.0
    beta0 = jax.random.normal(ks[1], (C,), jnp.float32) * 0.1
    mean0 = jax.random.normal(ks[2], (C,), jnp.float32) * 0.1
    var0 = jnp.abs(jax.random.normal(ks[3], (C,), jnp.float32)) * 0.1 + 0.5
    w0 = jax.random.normal(ks[4], (C, C, 1, 1), jnp.float32) * (1.0 / C) ** 0.5
    wdw = jax.random.normal(ks[5], (C, 1, 3, 3), jnp.float32) * (1.0 / 9.0) ** 0.5
    gamma1 = jax.random.normal(ks[6], (C,), jnp.float32) * 0.1 + 1.0
    beta1 = jax.random.normal(ks[7], (C,), jnp.float32) * 0.1
    mean1 = jax.random.normal(ks[8], (C,), jnp.float32) * 0.1
    var1 = jnp.abs(jax.random.normal(ks[9], (C,), jnp.float32)) * 0.1 + 0.5
    w1 = jax.random.normal(ks[10], (C, C, 1, 1), jnp.float32) * (1.0 / C) ** 0.5
    return (gamma0, beta0, mean0, var0, w0, wdw, gamma1, beta1, mean1, var1, w1)


def fold_params(raw):
    """Fold both (inference-mode) BatchNorms straight into the conv weights."""
    (gamma0, beta0, mean0, var0, w0, wdw,
     gamma1, beta1, mean1, var1, w1) = raw
    s0 = gamma0 / jnp.sqrt(var0 + EPS)
    b0 = beta0 - mean0 * s0
    s1 = gamma1 / jnp.sqrt(var1 + EPS)
    b1 = beta1 - mean1 * s1
    w0t = w0[:, :, 0, 0].T                                  # (in_C, out_C)
    w1t = w1[:, :, 0, 0].T
    # pw0(bn0(x)) = x @ (s0[:,None]*w0t) + b0 @ w0t
    w0_eff = s0[:, None] * w0t
    bias0 = (b0 @ w0t)[None, :]                             # (1, C)
    # pw1(bn1(dw(y))) = dw_{taps*s1}(y) @ w1t + b1 @ w1t
    dww = jnp.transpose(wdw[:, 0, :, :], (1, 2, 0)).reshape(9, -1)   # (9, C)
    dww_eff = dww * s1[None, :]
    bias1 = (b1 @ w1t)[None, :]                             # (1, C)
    return (w0_eff, bias0, dww_eff, w1t, bias1)


def ref_local_agg(x, raw):
    """Pure-JAX/XLA reference (same inference-mode BN semantics)."""
    (gamma0, beta0, mean0, var0, w0, wdw,
     gamma1, beta1, mean1, var1, w1) = raw
    C = x.shape[1]
    bshape = (1, C, 1, 1)

    def bn(v, g, b, m, s):
        return ((v - m.reshape(bshape)) / jnp.sqrt(s + EPS).reshape(bshape)
                * g.reshape(bshape) + b.reshape(bshape))

    dn = ('NCHW', 'OIHW', 'NCHW')
    y = bn(x, gamma0, beta0, mean0, var0)
    y = jax.lax.conv_general_dilated(y, w0, (1, 1), 'VALID', dimension_numbers=dn)
    y = jax.lax.conv_general_dilated(y, wdw, (1, 1), ((1, 1), (1, 1)),
                                     dimension_numbers=dn, feature_group_count=C)
    y = bn(y, gamma1, beta1, mean1, var1)
    y = jax.lax.conv_general_dilated(y, w1, (1, 1), 'VALID', dimension_numbers=dn)
    return y


if __name__ == "__main__":
    N, C, H, W = 2, 32, 16, 16
    key = jax.random.PRNGKey(0)
    kx, kp = jax.random.split(key)

    x = jax.random.normal(kx, (N, C, H, W), jnp.float32)
    raw = make_params(kp, C)
    folded = fold_params(raw)
    ref = ref_local_agg(x, raw)

    # Exact-semantics path (f32 MXU operands) with a forced tile_h=8 so the
    # cross-tile H-halo path (vt/vb = 1) is exercised: tight tolerance.
    out_f32 = jax.jit(functools.partial(local_agg, tile_h=8,
                                        matmul_dtype=jnp.float32))(x, *folded)
    out_f32 = jax.block_until_ready(out_f32)
    assert out_f32.shape == (N, C, H, W)
    assert jnp.allclose(out_f32, ref, rtol=1e-4, atol=1e-4), (
        float(jnp.max(jnp.abs(out_f32 - ref))))

    # Exact path again with the auto-picked (largest) tile_h.
    out_f32b = jax.jit(functools.partial(local_agg,
                                         matmul_dtype=jnp.float32))(x, *folded)
    out_f32b = jax.block_until_ready(out_f32b)
    assert jnp.allclose(out_f32b, ref, rtol=1e-4, atol=1e-4), (
        float(jnp.max(jnp.abs(out_f32b - ref))))

    # Default fast path: bf16 MXU operands + bf16-resident input, f32 accumulate.
    # Note the input, weights, and the depthwise output are rounded to bf16.
    out_bf16 = jax.jit(local_agg)(x, *folded)
    out_bf16 = jax.block_until_ready(out_bf16)
    err = float(jnp.max(jnp.abs(out_bf16 - ref)))
    assert err <= 5e-2 * float(jnp.max(jnp.abs(ref))) + 5e-2, err

    print("KERNEL_OK")
</pallas_src>

<mosaic_0001>
module attributes {stable_mosaic.version = 11 : i64} {
  func.func @_local_agg_kernel(%arg0: i32, %arg1: i32, %arg2: memref<1x16x16x32xf32, #tpu.memory_space<vmem>>, %arg3: memref<32x32xf32, #tpu.memory_space<vmem>>, %arg4: memref<1x32xf32, #tpu.memory_space<vmem>>, %arg5: memref<9x32xf32, #tpu.memory_space<vmem>>, %arg6: memref<32x32xf32, #tpu.memory_space<vmem>>, %arg7: memref<1x32xf32, #tpu.memory_space<vmem>>, %arg8: memref<1x8x16x32xf32, #tpu.memory_space<vmem>>, %arg9: memref<10x32x32xf32, #tpu.memory_space<vmem>>) attributes {dimension_semantics = [#tpu.dimension_semantics<parallel>, #tpu.dimension_semantics<arbitrary>], iteration_bounds = array<i64: 2, 2>, scalar_prefetch = 0 : i64, scratch_operands = 1 : i64, tpu.core_type = #tpu.core_type<tc>, window_params = [{transform_indices = @transform_0, window_bounds = array<i64: 1, 16, 16, 32>}, {pipeline_mode = #tpu.pipeline_mode<synchronous>, transform_indices = @transform_1, window_bounds = array<i64: 32, 32>}, {pipeline_mode = #tpu.pipeline_mode<synchronous>, transform_indices = @transform_2, window_bounds = array<i64: 1, 32>}, {pipeline_mode = #tpu.pipeline_mode<synchronous>, transform_indices = @transform_3, window_bounds = array<i64: 9, 32>}, {pipeline_mode = #tpu.pipeline_mode<synchronous>, transform_indices = @transform_4, window_bounds = array<i64: 32, 32>}, {pipeline_mode = #tpu.pipeline_mode<synchronous>, transform_indices = @transform_5, window_bounds = array<i64: 1, 32>}, {transform_indices = @transform_6, window_bounds = array<i64: 1, 8, 16, 32>}]} {
    %c8_i32 = arith.constant 8 : i32
    %0 = arith.muli %arg1, %c8_i32 : i32
    %c0 = arith.constant 0 : index
    %c0_0 = arith.constant 0 : index
    %1 = vector.load %arg3[%c0, %c0_0] : memref<32x32xf32, #tpu.memory_space<vmem>>, vector<32x32xf32>
    %c0_1 = arith.constant 0 : index
    %c0_2 = arith.constant 0 : index
    %2 = vector.load %arg4[%c0_1, %c0_2] : memref<1x32xf32, #tpu.memory_space<vmem>>, vector<1x32xf32>
    %c0_3 = arith.constant 0 : index
    %3 = arith.index_cast %0 : i32 to index
    %c0_4 = arith.constant 0 : index
    %c0_5 = arith.constant 0 : index
    %4 = vector.load %arg2[%c0_3, %3, %c0_4, %c0_5] : memref<1x16x16x32xf32, #tpu.memory_space<vmem>>, vector<1x8x16x32xf32>
    %5 = vector.shape_cast %4 : vector<1x8x16x32xf32> to vector<8x16x32xf32>
    %6 = vector.shape_cast %5 : vector<8x16x32xf32> to vector<128x32xf32>
    %cst = arith.constant dense<0.000000e+00> : vector<128x32xf32>
    %7 = tpu.matmul %6, %1, %cst {dimension_numbers = #tpu.dot_dimension_numbers<[1], [0], [0], [1], [0, 0, 1, 1], [], []>} : vector<128x32xf32>, vector<32x32xf32>, vector<128x32xf32> -> vector<128x32xf32>
    %8 = vector.broadcast %2 : vector<1x32xf32> to vector<128x32xf32>
    %9 = arith.addf %7, %8 : vector<128x32xf32>
    %10 = vector.shape_cast %9 : vector<128x32xf32> to vector<8x16x32xf32>
    %c0_i32 = arith.constant 0 : i32
    %11 = arith.cmpi sgt, %arg1, %c0_i32 : i32
    %cst_6 = arith.constant 1.000000e+00 : f32
    %cst_7 = arith.constant 0.000000e+00 : f32
    %12 = arith.select %11, %cst_6, %cst_7 : f32
    %c1_i32 = arith.constant 1 : i32
    %13 = arith.cmpi slt, %arg1, %c1_i32 : i32
    %cst_8 = arith.constant 1.000000e+00 : f32
    %cst_9 = arith.constant 0.000000e+00 : f32
    %14 = arith.select %13, %cst_8, %cst_9 : f32
    %c1_i32_10 = arith.constant 1 : i32
    %15 = arith.subi %0, %c1_i32_10 : i32
    %c0_i32_11 = arith.constant 0 : i32
    %16 = arith.maxsi %15, %c0_i32_11 : i32
    %c0_12 = arith.constant 0 : index
    %17 = arith.index_cast %16 : i32 to index
    %c0_13 = arith.constant 0 : index
    %c0_14 = arith.constant 0 : index
    %18 = vector.load %arg2[%c0_12, %17, %c0_13, %c0_14] : memref<1x16x16x32xf32, #tpu.memory_space<vmem>>, vector<1x1x16x32xf32>
    %19 = vector.shape_cast %18 : vector<1x1x16x32xf32> to vector<1x16x32xf32>
    %c8_i32_15 = arith.constant 8 : i32
    %20 = arith.addi %0, %c8_i32_15 : i32
    %c15_i32 = arith.constant 15 : i32
    %21 = arith.minsi %20, %c15_i32 : i32
    %c0_16 = arith.constant 0 : index
    %22 = arith.index_cast %21 : i32 to index
    %c0_17 = arith.constant 0 : index
    %c0_18 = arith.constant 0 : index
    %23 = vector.load %arg2[%c0_16, %22, %c0_17, %c0_18] : memref<1x16x16x32xf32, #tpu.memory_space<vmem>>, vector<1x1x16x32xf32>
    %24 = vector.shape_cast %23 : vector<1x1x16x32xf32> to vector<1x16x32xf32>
    %25 = vector.shape_cast %19 : vector<1x16x32xf32> to vector<16x32xf32>
    %cst_19 = arith.constant dense<0.000000e+00> : vector<16x32xf32>
    %26 = tpu.matmul %25, %1, %cst_19 {dimension_numbers = #tpu.dot_dimension_numbers<[1], [0], [0], [1], [0, 0, 1, 1], [], []>} : vector<16x32xf32>, vector<32x32xf32>, vector<16x32xf32> -> vector<16x32xf32>
    %27 = vector.broadcast %2 : vector<1x32xf32> to vector<16x32xf32>
    %28 = arith.addf %26, %27 : vector<16x32xf32>
    %29 = vector.broadcast %12 : f32 to vector<16x32xf32>
    %30 = arith.mulf %28, %29 : vector<16x32xf32>
    %31 = vector.shape_cast %24 : vector<1x16x32xf32> to vector<16x32xf32>
    %cst_20 = arith.constant dense<0.000000e+00> : vector<16x32xf32>
    %32 = tpu.matmul %31, %1, %cst_20 {dimension_numbers = #tpu.dot_dimension_numbers<[1], [0], [0], [1], [0, 0, 1, 1], [], []>} : vector<16x32xf32>, vector<32x32xf32>, vector<16x32xf32> -> vector<16x32xf32>
    %33 = vector.broadcast %2 : vector<1x32xf32> to vector<16x32xf32>
    %34 = arith.addf %32, %33 : vector<16x32xf32>
    %35 = vector.broadcast %14 : f32 to vector<16x32xf32>
    %36 = arith.mulf %34, %35 : vector<16x32xf32>
    %cst_21 = arith.constant 0.000000e+00 : f32
    %37 = vector.broadcast %cst_21 : f32 to vector<10x1x32xf32>
    %c0_22 = arith.constant 0 : index
    %c7 = arith.constant 7 : index
    %c0_23 = arith.constant 0 : index
    %38 = vector.load %arg9[%c0_22, %c7, %c0_23] : memref<10x32x32xf32, #tpu.memory_space<vmem>>, vector<10x1x32xf32>
    tpu.vector_store %arg9[%c0_22, %c7, %c0_23], %37 {strides = array<i32>} : memref<10x32x32xf32, #tpu.memory_space<vmem>>, vector<10x1x32xf32>,
    %c0_24 = arith.constant 0 : index
    %c24 = arith.constant 24 : index
    %c0_25 = arith.constant 0 : index
    %39 = vector.load %arg9[%c0_24, %c24, %c0_25] : memref<10x32x32xf32, #tpu.memory_space<vmem>>, vector<10x1x32xf32>
    tpu.vector_store %arg9[%c0_24, %c24, %c0_25], %37 {strides = array<i32>} : memref<10x32x32xf32, #tpu.memory_space<vmem>>, vector<10x1x32xf32>,
    %c1 = arith.constant 1 : index
    %c8 = arith.constant 8 : index
    %c0_26 = arith.constant 0 : index
    %40 = vector.load %arg9[%c1, %c8, %c0_26] : memref<10x32x32xf32, #tpu.memory_space<vmem>>, vector<8x16x32xf32>
    tpu.vector_store %arg9[%c1, %c8, %c0_26], %10 {strides = array<i32>} : memref<10x32x32xf32, #tpu.memory_space<vmem>>, vector<8x16x32xf32>,
    %41 = vector.shape_cast %30 : vector<16x32xf32> to vector<1x16x32xf32>
    %c0_27 = arith.constant 0 : index
    %c8_28 = arith.constant 8 : index
    %c0_29 = arith.constant 0 : index
    %42 = vector.load %arg9[%c0_27, %c8_28, %c0_29] : memref<10x32x32xf32, #tpu.memory_space<vmem>>, vector<1x16x32xf32>
    tpu.vector_store %arg9[%c0_27, %c8_28, %c0_29], %41 {strides = array<i32>} : memref<10x32x32xf32, #tpu.memory_space<vmem>>, vector<1x16x32xf32>,
    %43 = vector.shape_cast %36 : vector<16x32xf32> to vector<1x16x32xf32>
    %c9 = arith.constant 9 : index
    %c8_30 = arith.constant 8 : index
    %c0_31 = arith.constant 0 : index
    %44 = vector.load %arg9[%c9, %c8_30, %c0_31] : memref<10x32x32xf32, #tpu.memory_space<vmem>>, vector<1x16x32xf32>
    tpu.vector_store %arg9[%c9, %c8_30, %c0_31], %43 {strides = array<i32>} : memref<10x32x32xf32, #tpu.memory_space<vmem>>, vector<1x16x32xf32>,
    %cst_32 = arith.constant 0.000000e+00 : f32
    %45 = vector.broadcast %cst_32 : f32 to vector<8x16x32xf32>
    %c0_33 = arith.constant 0 : index
    %c7_34 = arith.constant 7 : index
    %c0_35 = arith.constant 0 : index
    %46 = vector.load %arg9[%c0_33, %c7_34, %c0_35] : memref<10x32x32xf32, #tpu.memory_space<vmem>>, vector<10x16x32xf32>
    %47 = vector.extract_strided_slice %46 {offsets = [0, 0, 0], sizes = [8, 16, 32], strides = [1, 1, 1]} : vector<10x16x32xf32> to vector<8x16x32xf32>
    %c0_36 = arith.constant 0 : index
    %c0_37 = arith.constant 0 : index
    %48 = vector.load %arg5[%c0_36, %c0_37] : memref<9x32xf32, #tpu.memory_space<vmem>>, vector<1x32xf32>
    %49 = vector.shape_cast %48 : vector<1x32xf32> to vector<32xf32>
    %50 = vector.shape_cast %49 : vector<32xf32> to vector<1x1x32xf32>
    %51 = vector.broadcast %50 : vector<1x1x32xf32> to vector<8x16x32xf32>
    %52 = arith.mulf %47, %51 : vector<8x16x32xf32>
    %53 = arith.addf %45, %52 : vector<8x16x32xf32>
    %54 = vector.extract_strided_slice %46 {offsets = [1, 0, 0], sizes = [8, 16, 32], strides = [1, 1, 1]} : vector<10x16x32xf32> to vector<8x16x32xf32>
    %c3 = arith.constant 3 : index
    %c0_38 = arith.constant 0 : index
    %55 = vector.load %arg5[%c3, %c0_38] : memref<9x32xf32, #tpu.memory_space<vmem>>, vector<1x32xf32>
    %56 = vector.shape_cast %55 : vector<1x32xf32> to vector<32xf32>
    %57 = vector.shape_cast %56 : vector<32xf32> to vector<1x1x32xf32>
    %58 = vector.broadcast %57 : vector<1x1x32xf32> to vector<8x16x32xf32>
    %59 = arith.mulf %54, %58 : vector<8x16x32xf32>
    %60 = arith.addf %53, %59 : vector<8x16x32xf32>
    %61 = vector.extract_strided_slice %46 {offsets = [2, 0, 0], sizes = [8, 16, 32], strides = [1, 1, 1]} : vector<10x16x32xf32> to vector<8x16x32xf32>
    %c6 = arith.constant 6 : index
    %c0_39 = arith.constant 0 : index
    %62 = vector.load %arg5[%c6, %c0_39] : memref<9x32xf32, #tpu.memory_space<vmem>>, vector<1x32xf32>
    %63 = vector.shape_cast %62 : vector<1x32xf32> to vector<32xf32>
    %64 = vector.shape_cast %63 : vector<32xf32> to vector<1x1x32xf32>
    %65 = vector.broadcast %64 : vector<1x1x32xf32> to vector<8x16x32xf32>
    %66 = arith.mulf %61, %65 : vector<8x16x32xf32>
    %67 = arith.addf %60, %66 : vector<8x16x32xf32>
    %c0_40 = arith.constant 0 : index
    %c8_41 = arith.constant 8 : index
    %c0_42 = arith.constant 0 : index
    %68 = vector.load %arg9[%c0_40, %c8_41, %c0_42] : memref<10x32x32xf32, #tpu.memory_space<vmem>>, vector<10x16x32xf32>
    %69 = vector.extract_strided_slice %68 {offsets = [0, 0, 0], sizes = [8, 16, 32], strides = [1, 1, 1]} : vector<10x16x32xf32> to vector<8x16x32xf32>
    %c1_43 = arith.constant 1 : index
    %c0_44 = arith.constant 0 : index
    %70 = vector.load %arg5[%c1_43, %c0_44] : memref<9x32xf32, #tpu.memory_space<vmem>>, vector<1x32xf32>
    %71 = vector.shape_cast %70 : vector<1x32xf32> to vector<32xf32>
    %72 = vector.shape_cast %71 : vector<32xf32> to vector<1x1x32xf32>
    %73 = vector.broadcast %72 : vector<1x1x32xf32> to vector<8x16x32xf32>
    %74 = arith.mulf %69, %73 : vector<8x16x32xf32>
    %75 = arith.addf %67, %74 : vector<8x16x32xf32>
    %76 = vector.extract_strided_slice %68 {offsets = [1, 0, 0], sizes = [8, 16, 32], strides = [1, 1, 1]} : vector<10x16x32xf32> to vector<8x16x32xf32>
    %c4 = arith.constant 4 : index
    %c0_45 = arith.constant 0 : index
    %77 = vector.load %arg5[%c4, %c0_45] : memref<9x32xf32, #tpu.memory_space<vmem>>, vector<1x32xf32>
    %78 = vector.shape_cast %77 : vector<1x32xf32> to vector<32xf32>
    %79 = vector.shape_cast %78 : vector<32xf32> to vector<1x1x32xf32>
    %80 = vector.broadcast %79 : vector<1x1x32xf32> to vector<8x16x32xf32>
    %81 = arith.mulf %76, %80 : vector<8x16x32xf32>
    %82 = arith.addf %75, %81 : vector<8x16x32xf32>
    %83 = vector.extract_strided_slice %68 {offsets = [2, 0, 0], sizes = [8, 16, 32], strides = [1, 1, 1]} : vector<10x16x32xf32> to vector<8x16x32xf32>
    %c7_46 = arith.constant 7 : index
    %c0_47 = arith.constant 0 : index
    %84 = vector.load %arg5[%c7_46, %c0_47] : memref<9x32xf32, #tpu.memory_space<vmem>>, vector<1x32xf32>
    %85 = vector.shape_cast %84 : vector<1x32xf32> to vector<32xf32>
    %86 = vector.shape_cast %85 : vector<32xf32> to vector<1x1x32xf32>
    %87 = vector.broadcast %86 : vector<1x1x32xf32> to vector<8x16x32xf32>
    %88 = arith.mulf %83, %87 : vector<8x16x32xf32>
    %89 = arith.addf %82, %88 : vector<8x16x32xf32>
    %c0_48 = arith.constant 0 : index
    %c9_49 = arith.constant 9 : index
    %c0_50 = arith.constant 0 : index
    %90 = vector.load %arg9[%c0_48, %c9_49, %c0_50] : memref<10x32x32xf32, #tpu.memory_space<vmem>>, vector<10x16x32xf32>
    %91 = vector.extract_strided_slice %90 {offsets = [0, 0, 0], sizes = [8, 16, 32], strides = [1, 1, 1]} : vector<10x16x32xf32> to vector<8x16x32xf32>
    %c2 = arith.constant 2 : index
    %c0_51 = arith.constant 0 : index
    %92 = vector.load %arg5[%c2, %c0_51] : memref<9x32xf32, #tpu.memory_space<vmem>>, vector<1x32xf32>
    %93 = vector.shape_cast %92 : vector<1x32xf32> to vector<32xf32>
    %94 = vector.shape_cast %93 : vector<32xf32> to vector<1x1x32xf32>
    %95 = vector.broadcast %94 : vector<1x1x32xf32> to vector<8x16x32xf32>
    %96 = arith.mulf %91, %95 : vector<8x16x32xf32>
    %97 = arith.addf %89, %96 : vector<8x16x32xf32>
    %98 = vector.extract_strided_slice %90 {offsets = [1, 0, 0], sizes = [8, 16, 32], strides = [1, 1, 1]} : vector<10x16x32xf32> to vector<8x16x32xf32>
    %c5 = arith.constant 5 : index
    %c0_52 = arith.constant 0 : index
    %99 = vector.load %arg5[%c5, %c0_52] : memref<9x32xf32, #tpu.memory_space<vmem>>, vector<1x32xf32>
    %100 = vector.shape_cast %99 : vector<1x32xf32> to vector<32xf32>
    %101 = vector.shape_cast %100 : vector<32xf32> to vector<1x1x32xf32>
    %102 = vector.broadcast %101 : vector<1x1x32xf32> to vector<8x16x32xf32>
    %103 = arith.mulf %98, %102 : vector<8x16x32xf32>
    %104 = arith.addf %97, %103 : vector<8x16x32xf32>
    %105 = vector.extract_strided_slice %90 {offsets = [2, 0, 0], sizes = [8, 16, 32], strides = [1, 1, 1]} : vector<10x16x32xf32> to vector<8x16x32xf32>
    %c8_53 = arith.constant 8 : index
    %c0_54 = arith.constant 0 : index
    %106 = vector.load %arg5[%c8_53, %c0_54] : memref<9x32xf32, #tpu.memory_space<vmem>>, vector<1x32xf32>
    %107 = vector.shape_cast %106 : vector<1x32xf32> to vector<32xf32>
    %108 = vector.shape_cast %107 : vector<32xf32> to vector<1x1x32xf32>
    %109 = vector.broadcast %108 : vector<1x1x32xf32> to vector<8x16x32xf32>
    %110 = arith.mulf %105, %109 : vector<8x16x32xf32>
    %111 = arith.addf %104, %110 : vector<8x16x32xf32>
    %112 = vector.shape_cast %111 : vector<8x16x32xf32> to vector<128x32xf32>
    %c0_55 = arith.constant 0 : index
    %c0_56 = arith.constant 0 : index
    %113 = vector.load %arg6[%c0_55, %c0_56] : memref<32x32xf32, #tpu.memory_space<vmem>>, vector<32x32xf32>
    %cst_57 = arith.constant dense<0.000000e+00> : vector<128x32xf32>
    %114 = tpu.matmul %112, %113, %cst_57 {dimension_numbers = #tpu.dot_dimension_numbers<[1], [0], [0], [1], [0, 0, 1, 1], [], []>} : vector<128x32xf32>, vector<32x32xf32>, vector<128x32xf32> -> vector<128x32xf32>
    %c0_58 = arith.constant 0 : index
    %c0_59 = arith.constant 0 : index
    %115 = vector.load %arg7[%c0_58, %c0_59] : memref<1x32xf32, #tpu.memory_space<vmem>>, vector<1x32xf32>
    %116 = vector.broadcast %115 : vector<1x32xf32> to vector<128x32xf32>
    %117 = arith.addf %114, %116 : vector<128x32xf32>
    %118 = vector.shape_cast %117 : vector<128x32xf32> to vector<8x16x32xf32>
    %c0_60 = arith.constant 0 : index
    %c0_61 = arith.constant 0 : index
    %c0_62 = arith.constant 0 : index
    %c0_63 = arith.constant 0 : index
    %119 = vector.load %arg8[%c0_60, %c0_61, %c0_62, %c0_63] : memref<1x8x16x32xf32, #tpu.memory_space<vmem>>, vector<1x8x16x32xf32>
    %120 = vector.shape_cast %119 : vector<1x8x16x32xf32> to vector<8x16x32xf32>
    %121 = vector.shape_cast %118 : vector<8x16x32xf32> to vector<1x8x16x32xf32>
    tpu.vector_store %arg8[%c0_60, %c0_61, %c0_62, %c0_63], %121 {strides = array<i32>} : memref<1x8x16x32xf32, #tpu.memory_space<vmem>>, vector<1x8x16x32xf32>,
    return
  }
  func.func @transform_0(%arg0: i32, %arg1: i32) -> (i32, i32, i32, i32) {
    %c0_i32 = arith.constant 0 : i32
    %c0_i32_0 = arith.constant 0 : i32
    %c0_i32_1 = arith.constant 0 : i32
    %c0_i32_2 = arith.constant 0 : i32
    return %arg0, %c0_i32, %c0_i32_0, %c0_i32_1 : i32, i32, i32, i32
  }
  func.func @transform_1(%arg0: i32, %arg1: i32) -> (i32, i32) {
    %c0_i32 = arith.constant 0 : i32
    %c0_i32_0 = arith.constant 0 : i32
    %c0_i32_1 = arith.constant 0 : i32
    return %c0_i32, %c0_i32_0 : i32, i32
  }
  func.func @transform_2(%arg0: i32, %arg1: i32) -> (i32, i32) {
    %c0_i32 = arith.constant 0 : i32
    %c0_i32_0 = arith.constant 0 : i32
    %c0_i32_1 = arith.constant 0 : i32
    return %c0_i32, %c0_i32_0 : i32, i32
  }
  func.func @transform_3(%arg0: i32, %arg1: i32) -> (i32, i32) {
    %c0_i32 = arith.constant 0 : i32
    %c0_i32_0 = arith.constant 0 : i32
    %c0_i32_1 = arith.constant 0 : i32
    return %c0_i32, %c0_i32_0 : i32, i32
  }
  func.func @transform_4(%arg0: i32, %arg1: i32) -> (i32, i32) {
    %c0_i32 = arith.constant 0 : i32
    %c0_i32_0 = arith.constant 0 : i32
    %c0_i32_1 = arith.constant 0 : i32
    return %c0_i32, %c0_i32_0 : i32, i32
  }
  func.func @transform_5(%arg0: i32, %arg1: i32) -> (i32, i32) {
    %c0_i32 = arith.constant 0 : i32
    %c0_i32_0 = arith.constant 0 : i32
    %c0_i32_1 = arith.constant 0 : i32
    return %c0_i32, %c0_i32_0 : i32, i32
  }
  func.func @transform_6(%arg0: i32, %arg1: i32) -> (i32, i32, i32, i32) {
    %c0_i32 = arith.constant 0 : i32
    %c0_i32_0 = arith.constant 0 : i32
    %c0_i32_1 = arith.constant 0 : i32
    return %arg0, %arg1, %c0_i32, %c0_i32_0 : i32, i32, i32, i32
  }
}

</mosaic_0001>

<llo_original>
// kernel: local_agg.1
$region0: #{local_agg.1}
  #allocation0 [shape = 'u32[]', space=smem, size = 0x4, offset = 0x4, fixed_abs, tag = 'smem constant byte address 0x4 - core index']
  #allocation1 [shape = 'u32[72,128]{1,0:T(1,128)}', space=vmem, size = 0x9000, scoped, tag = 'internal scratch']
  #allocation2 [shape = 'f32[10,32,32]{2,1,0:T(8,128)}', space=vmem, size = 0x28000, scoped, tag = 'scratch operand']
  %s0 = inlined_call_operand.hbm [shape: f32[2,16,16,32], index: 0, kind: input, shape index: {}]
  %s1 = inlined_call_operand.hbm [shape: f32[32,32], index: 1, kind: input, shape index: {}]
  %s2 = inlined_call_operand.vmem [shape: f32[1,32], index: 2, kind: input, shape index: {}]
  %s3 = inlined_call_operand.hbm [shape: f32[9,32], index: 3, kind: input, shape index: {}]
  %s4 = inlined_call_operand.hbm [shape: f32[32,32], index: 4, kind: input, shape index: {}]
  %s5 = inlined_call_operand.vmem [shape: f32[1,32], index: 5, kind: input, shape index: {}]
  %s6 = inlined_call_operand.hbm [shape: f32[2,16,16,32], index: 6, kind: output, shape index: {}]
  %s7 = sld [smem:[#allocation0]]
  $region73: #{local_agg.1} parent=0
    _
  %s9 = ssub.s32 1, %s7
  %s10 = scalar_select 0, %s9, %s7
  $region1: #{local_agg.1} parent=0
    #allocation3 [shape = 'u8[262144]{0}', space=vmem, size = 0x40000, scoped, tag = 'input window, operand 0']
    #allocation4 [shape = 's32[2]{0}', space=sflag, size = 0x8, scoped, tag = 'scoped memory for local_agg.1']
    #allocation5 [shape = 's32[2]{0}', space=sflag, size = 0x8, scoped, tag = 'scoped memory for local_agg.1']
    #allocation6 [shape = 'u8[16384]{0}', space=vmem, size = 0x4000, scoped, tag = 'input window, operand 1, single buffered']
    #allocation7 [shape = 's32[1]{0}', space=sflag, size = 0x4, scoped, tag = 'scoped memory for local_agg.1']
    #allocation8 [shape = 'u8[8192]{0}', space=vmem, size = 0x2000, scoped, tag = 'input window, operand 3, single buffered']
    #allocation9 [shape = 'u8[16384]{0}', space=vmem, size = 0x4000, scoped, tag = 'input window, operand 4, single buffered']
    #allocation10 [shape = 's32[1]{0}', space=sflag, size = 0x4, scoped, tag = 'scoped memory for local_agg.1']
    #allocation11 [shape = 'u8[131072]{0}', space=vmem, size = 0x20000, scoped, tag = 'output window, operand 0']
    %11 = vsyncpa [#allocation4], 0
    %s12 = scalar_lea.sflag [#allocation4], 1
    %13 = vsyncpa %s12, 0
    %14 = vsyncpa [#allocation7], 0
    %15 = vsyncpa [#allocation10], 0
    %16 = vsyncpa [#allocation5], 0
    %s17 = scalar_lea.sflag [#allocation5], 1
    %18 = vsyncpa %s17, 0
    loop: start=0, step=1, limit=6
    $region2: #{local_agg.1} parent=1 // loop_pre_header
      _
    $region3: #{local_agg.1} parent=1 // loop_header
      %s20 = sphi 0, %s24
      %p21 = scmp.ge.s32.totalorder %s20, 6
      %s27 = sphi 0, %s39
      %s28 = sphi 0, %s35
      %s29 = sphi 0, %s27
      %s30 = sphi 0, %s28
      %s31 = sphi 0, %s29
      %s32 = sphi 0, %s30
      %s42 = sphi 0, %s44
      %s45 = sphi 0, %s42
      %s46 = sphi 0, %s45
      %s62 = sphi 0, %s46
      %s66 = sphi 0, %s66
      %s68 = sphi 0, %s66
      %s69 = sphi 0, %s68
      %s83 = sphi 0, %s69
      %s87 = sphi 0, %s87
      %s89 = sphi 0, %s87
      %s90 = sphi 0, %s89
      %s104 = sphi 0, %s90
      %s108 = sphi 0, %s108
      %s110 = sphi 0, %s108
      %s111 = sphi 0, %s110
      %s125 = sphi 0, %s111
      %s129 = sphi 0, %s129
      %s131 = sphi 0, %s129
      %s132 = sphi 0, %s131
      %s146 = sphi 0, %s132
      %s150 = sphi 0, %s150
      %s152 = sphi 0, %s150
      %s153 = sphi 0, %s152
      %s167 = sphi 0, %s153
      %s175 = sphi 0, %s177
      %s178 = sphi 0, %s175
      %s179 = sphi 0, %s178
      %s195 = sphi 0, %s179
    $region4: #{local_agg.1} parent=1 // loop_header_branch
      %23 = sbr.rel (%p21) target = $region8
    $region5: #{local_agg.1} parent=1 // loop_body
      %s25 = ssub.s32 %s20, 1
      %s26 = ssub.s32 %s20, 2
      %s33 = sadd.s32 1, %s28
      %p34 = scmp.ge.s32.totalorder %s33, 2
      %s35 = scalar_select %p34, 0, %s33
      %s36 = sadd.s32 1, %s27
      %s37 = scalar_select %p34, %s36, %s27
      %p38 = scmp.ge.s32.totalorder %s37, 2
      %s39 = scalar_select %p38, 0, %s37
      %s40 = ssub.s32 %s27, %s39
      %p41 = scmp.eq.s32.totalorder %s40, 0
      %s43 = sadd.s32 %s42, 1
      %s44 = scalar_select %p41, %s42, %s43
      %p47 = pneg %p41
      %p48 = scmp.eq.s32.totalorder %s20, 3
      %p49 = por %p47, %p48
      %p50 = scmp.ne.s32.totalorder %s42, %s45
      %p51 = scmp.eq.s32.totalorder %s20, 0
      %p52 = por %p50, %p51
      %p53 = scmp.ne.s32.totalorder %s42, %s45
      %p54 = scmp.eq.s32.totalorder %s25, 3
      %p55 = por %p53, %p54
      %p56 = scmp.ne.s32.totalorder %s45, %s46
      %p57 = scmp.eq.s32.totalorder %s25, 0
      %p58 = por %p56, %p57
      %p59 = scmp.ne.s32.totalorder %s45, %s46
      %p60 = scmp.eq.s32.totalorder %s26, 3
      %p61 = por %p59, %p60
      %p63 = scmp.ne.s32.totalorder %s46, %s62
      %p64 = scmp.eq.s32.totalorder %s26, 0
      %p65 = por %p63, %p64
      %s67 = sadd.s32 %s66, 1
      %p70 = scmp.eq.s32.totalorder %s20, 3
      %p71 = scmp.ne.s32.totalorder %s66, %s68
      %p72 = scmp.eq.s32.totalorder %s20, 0
      %p73 = por %p71, %p72
      %p74 = scmp.ne.s32.totalorder %s66, %s68
      %p75 = scmp.eq.s32.totalorder %s25, 3
      %p76 = por %p74, %p75
      %p77 = scmp.ne.s32.totalorder %s68, %s69
      %p78 = scmp.eq.s32.totalorder %s25, 0
      %p79 = por %p77, %p78
      %p80 = scmp.ne.s32.totalorder %s68, %s69
      %p81 = scmp.eq.s32.totalorder %s26, 3
      %p82 = por %p80, %p81
      %p84 = scmp.ne.s32.totalorder %s69, %s83
      %p85 = scmp.eq.s32.totalorder %s26, 0
      %p86 = por %p84, %p85
      %s88 = sadd.s32 %s87, 1
      %p91 = scmp.eq.s32.totalorder %s20, 3
      %p92 = scmp.ne.s32.totalorder %s87, %s89
      %p93 = scmp.eq.s32.totalorder %s20, 0
      %p94 = por %p92, %p93
      %p95 = scmp.ne.s32.totalorder %s87, %s89
      %p96 = scmp.eq.s32.totalorder %s25, 3
      %p97 = por %p95, %p96
      %p98 = scmp.ne.s32.totalorder %s89, %s90
      %p99 = scmp.eq.s32.totalorder %s25, 0
      %p100 = por %p98, %p99
      %p101 = scmp.ne.s32.totalorder %s89, %s90
      %p102 = scmp.eq.s32.totalorder %s26, 3
      %p103 = por %p101, %p102
      %p105 = scmp.ne.s32.totalorder %s90, %s104
      %p106 = scmp.eq.s32.totalorder %s26, 0
      %p107 = por %p105, %p106
      %s109 = sadd.s32 %s108, 1
      %p112 = scmp.eq.s32.totalorder %s20, 3
      %p113 = scmp.ne.s32.totalorder %s108, %s110
      %p114 = scmp.eq.s32.totalorder %s20, 0
      %p115 = por %p113, %p114
      %p116 = scmp.ne.s32.totalorder %s108, %s110
      %p117 = scmp.eq.s32.totalorder %s25, 3
      %p118 = por %p116, %p117
      %p119 = scmp.ne.s32.totalorder %s110, %s111
      %p120 = scmp.eq.s32.totalorder %s25, 0
      %p121 = por %p119, %p120
      %p122 = scmp.ne.s32.totalorder %s110, %s111
      %p123 = scmp.eq.s32.totalorder %s26, 3
      %p124 = por %p122, %p123
      %p126 = scmp.ne.s32.totalorder %s111, %s125
      %p127 = scmp.eq.s32.totalorder %s26, 0
      %p128 = por %p126, %p127
      %s130 = sadd.s32 %s129, 1
      %p133 = scmp.eq.s32.totalorder %s20, 3
      %p134 = scmp.ne.s32.totalorder %s129, %s131
      %p135 = scmp.eq.s32.totalorder %s20, 0
      %p136 = por %p134, %p135
      %p137 = scmp.ne.s32.totalorder %s129, %s131
      %p138 = scmp.eq.s32.totalorder %s25, 3
      %p139 = por %p137, %p138
      %p140 = scmp.ne.s32.totalorder %s131, %s132
      %p141 = scmp.eq.s32.totalorder %s25, 0
      %p142 = por %p140, %p141
      %p143 = scmp.ne.s32.totalorder %s131, %s132
      %p144 = scmp.eq.s32.totalorder %s26, 3
      %p145 = por %p143, %p144
      %p147 = scmp.ne.s32.totalorder %s132, %s146
      %p148 = scmp.eq.s32.totalorder %s26, 0
      %p149 = por %p147, %p148
      %s151 = sadd.s32 %s150, 1
      %p154 = scmp.eq.s32.totalorder %s20, 3
      %p155 = scmp.ne.s32.totalorder %s150, %s152
      %p156 = scmp.eq.s32.totalorder %s20, 0
      %p157 = por %p155, %p156
      %p158 = scmp.ne.s32.totalorder %s150, %s152
      %p159 = scmp.eq.s32.totalorder %s25, 3
      %p160 = por %p158, %p159
      %p161 = scmp.ne.s32.totalorder %s152, %s153
      %p162 = scmp.eq.s32.totalorder %s25, 0
      %p163 = por %p161, %p162
      %p164 = scmp.ne.s32.totalorder %s152, %s153
      %p165 = scmp.eq.s32.totalorder %s26, 3
      %p166 = por %p164, %p165
      %p168 = scmp.ne.s32.totalorder %s153, %s167
      %p169 = scmp.eq.s32.totalorder %s26, 0
      %p170 = por %p168, %p169
      %s171 = ssub.s32 %s27, %s39
      %s172 = ssub.s32 %s28, %s35
      %s173 = sor.u32 %s171, %s172
      %p174 = scmp.eq.s32.totalorder %s173, 0
      %s176 = sadd.s32 %s175, 1
      %s177 = scalar_select %p174, %s175, %s176
      %p180 = pneg %p174
      %p181 = scmp.eq.s32.totalorder %s20, 3
      %p182 = por %p180, %p181
      %p183 = scmp.ne.s32.totalorder %s175, %s178
      %p184 = scmp.eq.s32.totalorder %s20, 0
      %p185 = por %p183, %p184
      %p186 = scmp.ne.s32.totalorder %s175, %s178
      %p187 = scmp.eq.s32.totalorder %s25, 3
      %p188 = por %p186, %p187
      %p189 = scmp.ne.s32.totalorder %s178, %s179
      %p190 = scmp.eq.s32.totalorder %s25, 0
      %p191 = por %p189, %p190
      %p192 = scmp.ne.s32.totalorder %s178, %s179
      %p193 = scmp.eq.s32.totalorder %s26, 3
      %p194 = por %p192, %p193
      %p196 = scmp.ne.s32.totalorder %s179, %s195
      %p197 = scmp.eq.s32.totalorder %s26, 0
      %p198 = por %p196, %p197
      %p199 = scmp.le.s32.totalorder 1, %s20
      %p200 = scmp.lt.s32.totalorder %s20, 5
      %p201 = pnand %p199, %p200
      %p202 = pneg %p201
      // Predicated region
      $region9: #{local_agg.1} parent=5 // pred_check
        _
      $region10: #{local_agg.1} parent=5 // pred_check_branch
        %204 = sbr.rel (%p201) target = $region12
      $region11: #{local_agg.1} parent=5 // pred_region
        %s205 = ssub.s32 %s20, 1
        // Predicated region
        $region13: #{local_agg.1} parent=11 // pred_check
          %p206 = pneg %p79
        $region14: #{local_agg.1} parent=11 // pred_check_branch
          %208 = sbr.rel (%p206) target = $region16
        $region15: #{local_agg.1} parent=11 // pred_region
          %210 = vsyncadd [#allocation7], 0
          %s211 = sshll.u32 %s1, 4
          %s212 = int_to_ptr.hbm [resolvable:$true] %s211
          %s213 = sshll.u32 [#allocation6], 4
          %s214 = int_to_ptr.vmem [resolvable:$true] %s213
          %219 = dma.hbm_to_vmem [thread:$0]  %s212, 512, %s214, [#allocation7], 128, 128, 8
        $region16: #{local_agg.1} parent=11 // pred_fallthru
          _
        // Predicated region
        $region17: #{local_agg.1} parent=11 // pred_check
          %p220 = pneg %p100
        $region18: #{local_agg.1} parent=11 // pred_check_branch
          %222 = sbr.rel (%p220) target = $region20
        $region19: #{local_agg.1} parent=11 // pred_region
          _
        $region20: #{local_agg.1} parent=11 // pred_fallthru
          _
        // Predicated region
        $region21: #{local_agg.1} parent=11 // pred_check
          %p223 = pneg %p121
        $region22: #{local_agg.1} parent=11 // pred_check_branch
          %225 = sbr.rel (%p223) target = $region24
        $region23: #{local_agg.1} parent=11 // pred_region
          %227 = vsyncadd [#allocation7], 0
          %s228 = sshll.u32 %s3, 4
          %s229 = int_to_ptr.hbm [resolvable:$true] %s228
          %s230 = sshll.u32 [#allocation8], 4
          %s231 = int_to_ptr.vmem [resolvable:$true] %s230
          %236 = dma.hbm_to_vmem [thread:$0]  %s229, 256, %s231, [#allocation7], 128, 128, 8
        $region24: #{local_agg.1} parent=11 // pred_fallthru
          _
        // Predicated region
        $region25: #{local_agg.1} parent=11 // pred_check
          %p237 = pneg %p142
        $region26: #{local_agg.1} parent=11 // pred_check_branch
          %239 = sbr.rel (%p237) target = $region28
        $region27: #{local_agg.1} parent=11 // pred_region
          %241 = vsyncadd [#allocation10], 0
          %s242 = sshll.u32 %s4, 4
          %s243 = int_to_ptr.hbm [resolvable:$true] %s242
          %s244 = sshll.u32 [#allocation9], 4
          %s245 = int_to_ptr.vmem [resolvable:$true] %s244
          %250 = dma.hbm_to_vmem [thread:$0]  %s243, 512, %s245, [#allocation10], 128, 128, 8
        $region28: #{local_agg.1} parent=11 // pred_fallthru
          _
        // Predicated region
        $region29: #{local_agg.1} parent=11 // pred_check
          %p251 = pneg %p163
        $region30: #{local_agg.1} parent=11 // pred_check_branch
          %253 = sbr.rel (%p251) target = $region32
        $region31: #{local_agg.1} parent=11 // pred_region
          _
        $region32: #{local_agg.1} parent=11 // pred_fallthru
          _
      $region12: #{local_agg.1} parent=5 // pred_fallthru
        _
      %p254 = scmp.lt.s32.totalorder %s20, 4
      // Predicated region
      $region33: #{local_agg.1} parent=5 // pred_check
        %p255 = pneg %p254
      $region34: #{local_agg.1} parent=5 // pred_check_branch
        %257 = sbr.rel (%p255) target = $region36
      $region35: #{local_agg.1} parent=5 // pred_region
        // Predicated region
        $region37: #{local_agg.1} parent=35 // pred_check
          %p258 = pneg %p52
        $region38: #{local_agg.1} parent=35 // pred_check_branch
          %260 = sbr.rel (%p258) target = $region40
        $region39: #{local_agg.1} parent=35 // pred_region
          %s261 = sand.u32 %s42, 1
          %s262 = scalar_lea.sflag [#allocation4], %s261
          %s263 = sand.u32 %s42, 1
          %s264 = smul.addr %s263, 256
          %s265 = scalar_lea.vmem [#allocation3], %s264
          %267 = vsyncadd %s262, 0
          %s268 = smul.addr %s27, 32
          %s269 = smul.addr %s268, 8
          %s270 = scalar_lea.hbm %s0, %s269
          %s271 = sshll.u32 %s270, 4
          %s272 = int_to_ptr.hbm [resolvable:$true] %s271
          %s273 = sshll.u32 %s265, 4
          %s274 = int_to_ptr.vmem [resolvable:$true] %s273
          %279 = dma.hbm_to_vmem [thread:$0]  %s272, 4096, %s274, %s262, 128, 128, 8
        $region40: #{local_agg.1} parent=35 // pred_fallthru
          _
      $region36: #{local_agg.1} parent=5 // pred_fallthru
        _
      %p280 = scmp.le.s32.totalorder 1, %s20
      %p281 = scmp.lt.s32.totalorder %s20, 5
      %p282 = pnand %p280, %p281
      %p283 = pneg %p282
      // Predicated region
      $region41: #{local_agg.1} parent=5 // pred_check
        _
      $region42: #{local_agg.1} parent=5 // pred_check_branch
        %285 = sbr.rel (%p282) target = $region44
      $region43: #{local_agg.1} parent=5 // pred_region
        %s286 = ssub.s32 %s20, 1
        %s287 = sand.u32 %s45, 1
        %s288 = scalar_lea.sflag [#allocation4], %s287
        %s289 = sand.u32 %s45, 1
        %s290 = smul.addr %s289, 256
        %s291 = scalar_lea.vmem [#allocation3], %s290
        // Predicated region
        $region45: #{local_agg.1} parent=43 // pred_check
          %p292 = pneg %p58
        $region46: #{local_agg.1} parent=43 // pred_check_branch
          %294 = sbr.rel (%p292) target = $region48
        $region47: #{local_agg.1} parent=43 // pred_region
          %296 = dma.done %s288, 4096
        $region48: #{local_agg.1} parent=43 // pred_fallthru
          _
        // Predicated region
        $region49: #{local_agg.1} parent=43 // pred_check
          %p297 = pneg %p79
        $region50: #{local_agg.1} parent=43 // pred_check_branch
          %299 = sbr.rel (%p297) target = $region52
        $region51: #{local_agg.1} parent=43 // pred_region
          %301 = dma.done [#allocation7], 512
        $region52: #{local_agg.1} parent=43 // pred_fallthru
          _
        // Predicated region
        $region53: #{local_agg.1} parent=43 // pred_check
          %p302 = pneg %p121
        $region54: #{local_agg.1} parent=43 // pred_check_branch
          %304 = sbr.rel (%p302) target = $region56
        $region55: #{local_agg.1} parent=43 // pred_region
          %306 = dma.done [#allocation7], 256
        $region56: #{local_agg.1} parent=43 // pred_fallthru
          _
        // Predicated region
        $region57: #{local_agg.1} parent=43 // pred_check
          %p307 = pneg %p142
        $region58: #{local_agg.1} parent=43 // pred_check_branch
          %309 = sbr.rel (%p307) target = $region60
        $region59: #{local_agg.1} parent=43 // pred_region
          %311 = dma.done [#allocation10], 512
        $region60: #{local_agg.1} parent=43 // pred_fallthru
          _
        %s312 = sand.u32 %s45, 1
        %s313 = scalar_lea.sflag [#allocation4], %s312
        %s314 = sand.u32 %s45, 1
        %s315 = smul.addr %s314, 256
        %s316 = scalar_lea.vmem [#allocation3], %s315
        %p317 = pneg %p58
        %p318 = pneg %p55
        %p319 = pneg %p79
        %p320 = pneg %p76
        %p321 = pneg %p100
        %p322 = pneg %p97
        %p323 = pneg %p121
        %p324 = pneg %p118
        %p325 = pneg %p142
        %p326 = pneg %p139
        %p327 = pneg %p163
        %p328 = pneg %p160
        %p329 = pneg %p191
        %p330 = pneg %p188
        %s331 = sand.u32 %s178, 1
        %s332 = scalar_lea.sflag [#allocation5], %s331
        %s333 = sand.u32 %s178, 1
        %s334 = smul.addr %s333, 128
        %s335 = scalar_lea.vmem [#allocation11], %s334
        %s336 = smul.u32 8, %s30
        %s337 = smul.u32 %s30, 8
        %v338 = vld [vmem:[#allocation6] sm:$0xff]
        %v339 = vld [vmem:[#allocation6 + $0x8] sm:$0xff]
        %v340 = vld [vmem:[#allocation6 + $0x10] sm:$0xff]
        %v341 = vld [vmem:[#allocation6 + $0x18] sm:$0xff]
        %v342 = vld [vmem:[%s2] sm:$0x1]
        %s343 = smul.u32 %s337, 16
        %s344 = scalar_lea.vmem %s291, %s343 [#allocation3]
        %v345 = vld [vmem:[%s344] sm:$0xff]
        %v346 = vld [vmem:[%s344 + $0x8] sm:$0xff]
        %v347 = vld [vmem:[%s344 + $0x10] sm:$0xff]
        %v348 = vld [vmem:[%s344 + $0x18] sm:$0xff]
        %v349 = vld [vmem:[%s344 + $0x20] sm:$0xff]
        %v350 = vld [vmem:[%s344 + $0x28] sm:$0xff]
        %v351 = vld [vmem:[%s344 + $0x30] sm:$0xff]
        %v352 = vld [vmem:[%s344 + $0x38] sm:$0xff]
        %v353 = vld [vmem:[%s344 + $0x40] sm:$0xff]
        %v354 = vld [vmem:[%s344 + $0x48] sm:$0xff]
        %v355 = vld [vmem:[%s344 + $0x50] sm:$0xff]
        %v356 = vld [vmem:[%s344 + $0x58] sm:$0xff]
        %v357 = vld [vmem:[%s344 + $0x60] sm:$0xff]
        %v358 = vld [vmem:[%s344 + $0x68] sm:$0xff]
        %v359 = vld [vmem:[%s344 + $0x70] sm:$0xff]
        %v360 = vld [vmem:[%s344 + $0x78] sm:$0xff]
        %v362 = vperm.slane %v342, 0
        %vm364 = vcmask 261120
        %v366 = vsel %vm364, %v345, 0
        %v369 = vsel %vm364, %v346, 0
        %v372 = vsel %vm364, %v347, 0
        %v375 = vsel %vm364, %v348, 0
        %v378 = vsel %vm364, %v349, 0
        %v381 = vsel %vm364, %v350, 0
        %v384 = vsel %vm364, %v351, 0
        %v387 = vsel %vm364, %v352, 0
        %v390 = vsel %vm364, %v353, 0
        %v393 = vsel %vm364, %v354, 0
        %v396 = vsel %vm364, %v355, 0
        %v399 = vsel %vm364, %v356, 0
        %v402 = vsel %vm364, %v357, 0
        %v405 = vsel %vm364, %v358, 0
        %v408 = vsel %vm364, %v359, 0
        %v411 = vsel %vm364, %v360, 0
        %413 = vmatpush.msra.mxu0 0.0
        %414 = vmatpush.msra.mxu0 0.0
        %415 = vmatpush.msra.mxu0 0.0
        %416 = vmatpush.msra.mxu0 0.0
        %417 = vmatpush.msra.mxu0 0.0
        %418 = vmatpush.msra.mxu0 0.0
        %419 = vmatpush.msra.mxu0 0.0
        %420 = vmatpush.msra.mxu0 0.0
        %421 = vmatpush.msra.mxu0 0.0
        %422 = vmatpush.msra.mxu0 0.0
        %423 = vmatpush.msra.mxu0 0.0
        %424 = vmatpush.msra.mxu0 0.0
        %425 = vmatpush.msra.mxu0 %v341
        %426 = vmatpush.msra.mxu0 %v340
        %427 = vmatpush.msra.mxu0 %v339
        %428 = vmatpush.msra.mxu0 %v338
        %429 = vmatmul.f32.gmra.mxu0 %v366
        %v430 = vpop.f32.mrf.mxu0
        %v431 = vadd.f32 %v362, %v430
        %432 = vmatmul.f32.gmra.mxu0 %v369
        %v433 = vpop.f32.mrf.mxu0
        %v434 = vadd.f32 %v362, %v433
        %435 = vmatmul.f32.gmra.mxu0 %v372
        %v436 = vpop.f32.mrf.mxu0
        %v437 = vadd.f32 %v362, %v436
        %438 = vmatmul.f32.gmra.mxu0 %v375
        %v439 = vpop.f32.mrf.mxu0
        %v440 = vadd.f32 %v362, %v439
        %441 = vmatmul.f32.gmra.mxu0 %v378
        %v442 = vpop.f32.mrf.mxu0
        %v443 = vadd.f32 %v362, %v442
        %444 = vmatmul.f32.gmra.mxu0 %v381
        %v445 = vpop.f32.mrf.mxu0
        %v446 = vadd.f32 %v362, %v445
        %447 = vmatmul.f32.gmra.mxu0 %v384
        %v448 = vpop.f32.mrf.mxu0
        %v449 = vadd.f32 %v362, %v448
        %450 = vmatmul.f32.gmra.mxu0 %v387
        %v451 = vpop.f32.mrf.mxu0
        %v452 = vadd.f32 %v362, %v451
        %453 = vmatmul.f32.gmra.mxu0 %v390
        %v454 = vpop.f32.mrf.mxu0
        %v455 = vadd.f32 %v362, %v454
        %456 = vmatmul.f32.gmra.mxu0 %v393
        %v457 = vpop.f32.mrf.mxu0
        %v458 = vadd.f32 %v362, %v457
        %459 = vmatmul.f32.gmra.mxu0 %v396
        %v460 = vpop.f32.mrf.mxu0
        %v461 = vadd.f32 %v362, %v460
        %462 = vmatmul.f32.gmra.mxu0 %v399
        %v463 = vpop.f32.mrf.mxu0
        %v464 = vadd.f32 %v362, %v463
        %465 = vmatmul.f32.gmra.mxu0 %v402
        %v466 = vpop.f32.mrf.mxu0
        %v467 = vadd.f32 %v362, %v466
        %468 = vmatmul.f32.gmra.mxu0 %v405
        %v469 = vpop.f32.mrf.mxu0
        %v470 = vadd.f32 %v362, %v469
        %471 = vmatmul.f32.gmra.mxu0 %v408
        %v472 = vpop.f32.mrf.mxu0
        %v473 = vadd.f32 %v362, %v472
        %474 = vmatmul.f32.gmra.mxu0 %v411
        %v475 = vpop.f32.mrf.mxu0
        %v476 = vadd.f32 %v362, %v475
        %477 = vdwg.mxu0
        %p478 = scmp.gt.s32.totalorder %s30, 0
        %s479 = scalar_select %p478, 1.0, 0.0
        %p480 = scmp.lt.s32.totalorder %s30, 1
        %s481 = scalar_select %p480, 1.0, 0.0
        %s482 = ssub.s32 %s337, 1
        %p483 = scmp.gt.s32.totalorder %s482, 0
        %s484 = scalar_select %p483, %s482, 0
        %s485 = smul.u32 %s484, 16
        %s486 = scalar_lea.vmem %s291, %s485 [#allocation3]
        %v487 = vld [vmem:[%s486] sm:$0xff]
        %v488 = vld [vmem:[%s486 + $0x8] sm:$0xff]
        %s489 = sadd.s32 %s337, 8
        %p490 = scmp.lt.s32.totalorder %s489, 15
        %s491 = scalar_select %p490, %s489, 15
        %s492 = smul.u32 %s491, 16
        %s493 = scalar_lea.vmem %s291, %s492 [#allocation3]
        %v494 = vld [vmem:[%s493] sm:$0xff]
        %v495 = vld [vmem:[%s493 + $0x8] sm:$0xff]
        %v497 = vsel %vm364, %v487, 0
        %v500 = vsel %vm364, %v488, 0
        %502 = vmatpush.msra.mxu0 0.0
        %503 = vmatpush.msra.mxu0 0.0
        %504 = vmatpush.msra.mxu0 0.0
        %505 = vmatpush.msra.mxu0 0.0
        %506 = vmatpush.msra.mxu0 0.0
        %507 = vmatpush.msra.mxu0 0.0
        %508 = vmatpush.msra.mxu0 0.0
        %509 = vmatpush.msra.mxu0 0.0
        %510 = vmatpush.msra.mxu0 0.0
        %511 = vmatpush.msra.mxu0 0.0
        %512 = vmatpush.msra.mxu0 0.0
        %513 = vmatpush.msra.mxu0 0.0
        %514 = vmatpush.msra.mxu0 %v341
        %515 = vmatpush.msra.mxu0 %v340
        %516 = vmatpush.msra.mxu0 %v339
        %517 = vmatpush.msra.mxu0 %v338
        %518 = vmatmul.f32.gmra.mxu0 %v497
        %v519 = vpop.f32.mrf.mxu0
        %v520 = vadd.f32 %v362, %v519
        %521 = vmatmul.f32.gmra.mxu0 %v500
        %v522 = vpop.f32.mrf.mxu0
        %v523 = vadd.f32 %v362, %v522
        %524 = vdwg.mxu0
        %v525 = vstv %s479
        %v526 = vmul.f32 %v520, %v525
        %v527 = vmul.f32 %v523, %v525
        %v529 = vsel %vm364, %v494, 0
        %v532 = vsel %vm364, %v495, 0
        %534 = vmatpush.msra.mxu0 0.0
        %535 = vmatpush.msra.mxu0 0.0
        %536 = vmatpush.msra.mxu0 0.0
        %537 = vmatpush.msra.mxu0 0.0
        %538 = vmatpush.msra.mxu0 0.0
        %539 = vmatpush.msra.mxu0 0.0
        %540 = vmatpush.msra.mxu0 0.0
        %541 = vmatpush.msra.mxu0 0.0
        %542 = vmatpush.msra.mxu0 0.0
        %543 = vmatpush.msra.mxu0 0.0
        %544 = vmatpush.msra.mxu0 0.0
        %545 = vmatpush.msra.mxu0 0.0
        %546 = vmatpush.msra.mxu0 %v341
        %547 = vmatpush.msra.mxu0 %v340
        %548 = vmatpush.msra.mxu0 %v339
        %549 = vmatpush.msra.mxu0 %v338
        %550 = vmatmul.f32.gmra.mxu0 %v529
        %v551 = vpop.f32.mrf.mxu0
        %v552 = vadd.f32 %v362, %v551
        %553 = vmatmul.f32.gmra.mxu0 %v532
        %v554 = vpop.f32.mrf.mxu0
        %v555 = vadd.f32 %v362, %v554
        %556 = vdwg.mxu0
        %v557 = vstv %s481
        %v558 = vmul.f32 %v552, %v557
        %v559 = vmul.f32 %v555, %v557
        %vm560 = vcmask 253952
        %561 = vst.msk [vmem:[#allocation2 + $0x7] sm:$0x1] %vm560, 0.0
        %562 = vst.msk [vmem:[#allocation2 + $0x27] sm:$0x1] %vm560, 0.0
        %563 = vst.msk [vmem:[#allocation2 + $0x47] sm:$0x1] %vm560, 0.0
        %564 = vst.msk [vmem:[#allocation2 + $0x67] sm:$0x1] %vm560, 0.0
        %565 = vst.msk [vmem:[#allocation2 + $0x87] sm:$0x1] %vm560, 0.0
        %566 = vst.msk [vmem:[#allocation2 + $0xa7] sm:$0x1] %vm560, 0.0
        %567 = vst.msk [vmem:[#allocation2 + $0xc7] sm:$0x1] %vm560, 0.0
        %568 = vst.msk [vmem:[#allocation2 + $0xe7] sm:$0x1] %vm560, 0.0
        %569 = vst.msk [vmem:[#allocation2 + $0x107] sm:$0x1] %vm560, 0.0
        %570 = vst.msk [vmem:[#allocation2 + $0x127] sm:$0x1] %vm560, 0.0
        %571 = vst.msk [vmem:[#allocation2 + $0x18] sm:$0x1] %vm560, 0.0
        %572 = vst.msk [vmem:[#allocation2 + $0x38] sm:$0x1] %vm560, 0.0
        %573 = vst.msk [vmem:[#allocation2 + $0x58] sm:$0x1] %vm560, 0.0
        %574 = vst.msk [vmem:[#allocation2 + $0x78] sm:$0x1] %vm560, 0.0
        %575 = vst.msk [vmem:[#allocation2 + $0x98] sm:$0x1] %vm560, 0.0
        %576 = vst.msk [vmem:[#allocation2 + $0xb8] sm:$0x1] %vm560, 0.0
        %577 = vst.msk [vmem:[#allocation2 + $0xd8] sm:$0x1] %vm560, 0.0
        %578 = vst.msk [vmem:[#allocation2 + $0xf8] sm:$0x1] %vm560, 0.0
        %579 = vst.msk [vmem:[#allocation2 + $0x118] sm:$0x1] %vm560, 0.0
        %580 = vst.msk [vmem:[#allocation2 + $0x138] sm:$0x1] %vm560, 0.0
        %s581 = scalar_lea.vmem [#allocation2], 32
        %582 = vst.msk [vmem:[%s581 + $0x8] sm:$0xff] %vm364, %v431
        %583 = vst.msk [vmem:[%s581 + $0x10] sm:$0xff] %vm364, %v434
        %584 = vst.msk [vmem:[%s581 + $0x28] sm:$0xff] %vm364, %v437
        %585 = vst.msk [vmem:[%s581 + $0x30] sm:$0xff] %vm364, %v440
        %586 = vst.msk [vmem:[%s581 + $0x48] sm:$0xff] %vm364, %v443
        %587 = vst.msk [vmem:[%s581 + $0x50] sm:$0xff] %vm364, %v446
        %588 = vst.msk [vmem:[%s581 + $0x68] sm:$0xff] %vm364, %v449
        %589 = vst.msk [vmem:[%s581 + $0x70] sm:$0xff] %vm364, %v452
        %590 = vst.msk [vmem:[%s581 + $0x88] sm:$0xff] %vm364, %v455
        %591 = vst.msk [vmem:[%s581 + $0x90] sm:$0xff] %vm364, %v458
        %592 = vst.msk [vmem:[%s581 + $0xa8] sm:$0xff] %vm364, %v461
        %593 = vst.msk [vmem:[%s581 + $0xb0] sm:$0xff] %vm364, %v464
        %594 = vst.msk [vmem:[%s581 + $0xc8] sm:$0xff] %vm364, %v467
        %595 = vst.msk [vmem:[%s581 + $0xd0] sm:$0xff] %vm364, %v470
        %596 = vst.msk [vmem:[%s581 + $0xe8] sm:$0xff] %vm364, %v473
        %597 = vst.msk [vmem:[%s581 + $0xf0] sm:$0xff] %vm364, %v476
        %598 = vst.msk [vmem:[#allocation2 + $0x8] sm:$0xff] %vm364, %v526
        %599 = vst.msk [vmem:[#allocation2 + $0x10] sm:$0xff] %vm364, %v527
        %s600 = scalar_lea.vmem [#allocation2], 288
        %601 = vst.msk [vmem:[%s600 + $0x8] sm:$0xff] %vm364, %v558
        %602 = vst.msk [vmem:[%s600 + $0x10] sm:$0xff] %vm364, %v559
        %v603 = vld [vmem:[#allocation2 + $0x7] sm:$0xff]
        %v604 = vld [vmem:[#allocation2 + $0xf] sm:$0xff]
        %v605 = vld [vmem:[#allocation2 + $0x27] sm:$0xff]
        %v606 = vld [vmem:[#allocation2 + $0x2f] sm:$0xff]
        %v607 = vld [vmem:[#allocation2 + $0x47] sm:$0xff]
        %v608 = vld [vmem:[#allocation2 + $0x4f] sm:$0xff]
        %v609 = vld [vmem:[#allocation2 + $0x67] sm:$0xff]
        %v610 = vld [vmem:[#allocation2 + $0x6f] sm:$0xff]
        %v611 = vld [vmem:[#allocation2 + $0x87] sm:$0xff]
        %v612 = vld [vmem:[#allocation2 + $0x8f] sm:$0xff]
        %v613 = vld [vmem:[#allocation2 + $0xa7] sm:$0xff]
        %v614 = vld [vmem:[#allocation2 + $0xaf] sm:$0xff]
        %v615 = vld [vmem:[#allocation2 + $0xc7] sm:$0xff]
        %v616 = vld [vmem:[#allocation2 + $0xcf] sm:$0xff]
        %v617 = vld [vmem:[#allocation2 + $0xe7] sm:$0xff]
        %v618 = vld [vmem:[#allocation2 + $0xef] sm:$0xff]
        %v619 = vld [vmem:[#allocation2 + $0x107] sm:$0xff]
        %v620 = vld [vmem:[#allocation2 + $0x10f] sm:$0xff]
        %v621 = vld [vmem:[#allocation2 + $0x127] sm:$0xff]
        %v622 = vld [vmem:[#allocation2 + $0x12f] sm:$0xff]
        %v623 = vld [vmem:[#allocation8] sm:$0x1]
        %v624 = vperm.slane %v623, 0
        %v625 = vmul.f32 %v603, %v624
        %v626 = vmul.f32 %v604, %v624
        %v627 = vmul.f32 %v605, %v624
        %v628 = vmul.f32 %v606, %v624
        %v629 = vmul.f32 %v607, %v624
        %v630 = vmul.f32 %v608, %v624
        %v631 = vmul.f32 %v609, %v624
        %v632 = vmul.f32 %v610, %v624
        %v633 = vmul.f32 %v611, %v624
        %v634 = vmul.f32 %v612, %v624
        %v635 = vmul.f32 %v613, %v624
        %v636 = vmul.f32 %v614, %v624
        %v637 = vmul.f32 %v615, %v624
        %v638 = vmul.f32 %v616, %v624
        %v639 = vmul.f32 %v617, %v624
        %v640 = vmul.f32 %v618, %v624
        %v641 = vadd.f32 %v625, 0.0
        %v642 = vadd.f32 %v626, 0.0
        %v643 = vadd.f32 %v627, 0.0
        %v644 = vadd.f32 %v628, 0.0
        %v645 = vadd.f32 %v629, 0.0
        %v646 = vadd.f32 %v630, 0.0
        %v647 = vadd.f32 %v631, 0.0
        %v648 = vadd.f32 %v632, 0.0
        %v649 = vadd.f32 %v633, 0.0
        %v650 = vadd.f32 %v634, 0.0
        %v651 = vadd.f32 %v635, 0.0
        %v652 = vadd.f32 %v636, 0.0
        %v653 = vadd.f32 %v637, 0.0
        %v654 = vadd.f32 %v638, 0.0
        %v655 = vadd.f32 %v639, 0.0
        %v656 = vadd.f32 %v640, 0.0
        %v657 = vld [vmem:[#allocation8 + $0x3] sm:$0x1]
        %v658 = vperm.slane %v657, 0
        %v659 = vmul.f32 %v605, %v658
        %v660 = vmul.f32 %v606, %v658
        %v661 = vmul.f32 %v607, %v658
        %v662 = vmul.f32 %v608, %v658
        %v663 = vmul.f32 %v609, %v658
        %v664 = vmul.f32 %v610, %v658
        %v665 = vmul.f32 %v611, %v658
        %v666 = vmul.f32 %v612, %v658
        %v667 = vmul.f32 %v613, %v658
        %v668 = vmul.f32 %v614, %v658
        %v669 = vmul.f32 %v615, %v658
        %v670 = vmul.f32 %v616, %v658
        %v671 = vmul.f32 %v617, %v658
        %v672 = vmul.f32 %v618, %v658
        %v673 = vmul.f32 %v619, %v658
        %v674 = vmul.f32 %v620, %v658
        %v675 = vadd.f32 %v641, %v659
        %v676 = vadd.f32 %v642, %v660
        %v677 = vadd.f32 %v643, %v661
        %v678 = vadd.f32 %v644, %v662
        %v679 = vadd.f32 %v645, %v663
        %v680 = vadd.f32 %v646, %v664
        %v681 = vadd.f32 %v647, %v665
        %v682 = vadd.f32 %v648, %v666
        %v683 = vadd.f32 %v649, %v667
        %v684 = vadd.f32 %v650, %v668
        %v685 = vadd.f32 %v651, %v669
        %v686 = vadd.f32 %v652, %v670
        %v687 = vadd.f32 %v653, %v671
        %v688 = vadd.f32 %v654, %v672
        %v689 = vadd.f32 %v655, %v673
        %v690 = vadd.f32 %v656, %v674
        %v691 = vld [vmem:[#allocation8 + $0x6] sm:$0x1]
        %v692 = vperm.slane %v691, 0
        %v693 = vmul.f32 %v607, %v692
        %v694 = vmul.f32 %v608, %v692
        %v695 = vmul.f32 %v609, %v692
        %v696 = vmul.f32 %v610, %v692
        %v697 = vmul.f32 %v611, %v692
        %v698 = vmul.f32 %v612, %v692
        %v699 = vmul.f32 %v613, %v692
        %v700 = vmul.f32 %v614, %v692
        %v701 = vmul.f32 %v615, %v692
        %v702 = vmul.f32 %v616, %v692
        %v703 = vmul.f32 %v617, %v692
        %v704 = vmul.f32 %v618, %v692
        %v705 = vmul.f32 %v619, %v692
        %v706 = vmul.f32 %v620, %v692
        %v707 = vmul.f32 %v621, %v692
        %v708 = vmul.f32 %v622, %v692
        %v709 = vadd.f32 %v675, %v693
        %v710 = vadd.f32 %v676, %v694
        %v711 = vadd.f32 %v677, %v695
        %v712 = vadd.f32 %v678, %v696
        %v713 = vadd.f32 %v679, %v697
        %v714 = vadd.f32 %v680, %v698
        %v715 = vadd.f32 %v681, %v699
        %v716 = vadd.f32 %v682, %v700
        %v717 = vadd.f32 %v683, %v701
        %v718 = vadd.f32 %v684, %v702
        %v719 = vadd.f32 %v685, %v703
        %v720 = vadd.f32 %v686, %v704
        %v721 = vadd.f32 %v687, %v705
        %v722 = vadd.f32 %v688, %v706
        %v723 = vadd.f32 %v689, %v707
        %v724 = vadd.f32 %v690, %v708
        %v725 = vld [vmem:[#allocation2 + $0x8] sm:$0xff]
        %v726 = vld [vmem:[#allocation2 + $0x10] sm:$0xff]
        %v727 = vld [vmem:[#allocation2 + $0x28] sm:$0xff]
        %v728 = vld [vmem:[#allocation2 + $0x30] sm:$0xff]
        %v729 = vld [vmem:[#allocation2 + $0x48] sm:$0xff]
        %v730 = vld [vmem:[#allocation2 + $0x50] sm:$0xff]
        %v731 = vld [vmem:[#allocation2 + $0x68] sm:$0xff]
        %v732 = vld [vmem:[#allocation2 + $0x70] sm:$0xff]
        %v733 = vld [vmem:[#allocation2 + $0x88] sm:$0xff]
        %v734 = vld [vmem:[#allocation2 + $0x90] sm:$0xff]
        %v735 = vld [vmem:[#allocation2 + $0xa8] sm:$0xff]
        %v736 = vld [vmem:[#allocation2 + $0xb0] sm:$0xff]
        %v737 = vld [vmem:[#allocation2 + $0xc8] sm:$0xff]
        %v738 = vld [vmem:[#allocation2 + $0xd0] sm:$0xff]
        %v739 = vld [vmem:[#allocation2 + $0xe8] sm:$0xff]
        %v740 = vld [vmem:[#allocation2 + $0xf0] sm:$0xff]
        %v741 = vld [vmem:[#allocation2 + $0x108] sm:$0xff]
        %v742 = vld [vmem:[#allocation2 + $0x110] sm:$0xff]
        %v743 = vld [vmem:[#allocation2 + $0x128] sm:$0xff]
        %v744 = vld [vmem:[#allocation2 + $0x130] sm:$0xff]
        %v745 = vld [vmem:[#allocation8 + $0x1] sm:$0x1]
        %v746 = vperm.slane %v745, 0
        %v747 = vmul.f32 %v725, %v746
        %v748 = vmul.f32 %v726, %v746
        %v749 = vmul.f32 %v727, %v746
        %v750 = vmul.f32 %v728, %v746
        %v751 = vmul.f32 %v729, %v746
        %v752 = vmul.f32 %v730, %v746
        %v753 = vmul.f32 %v731, %v746
        %v754 = vmul.f32 %v732, %v746
        %v755 = vmul.f32 %v733, %v746
        %v756 = vmul.f32 %v734, %v746
        %v757 = vmul.f32 %v735, %v746
        %v758 = vmul.f32 %v736, %v746
        %v759 = vmul.f32 %v737, %v746
        %v760 = vmul.f32 %v738, %v746
        %v761 = vmul.f32 %v739, %v746
        %v762 = vmul.f32 %v740, %v746
        %v763 = vadd.f32 %v709, %v747
        %v764 = vadd.f32 %v710, %v748
        %v765 = vadd.f32 %v711, %v749
        %v766 = vadd.f32 %v712, %v750
        %v767 = vadd.f32 %v713, %v751
        %v768 = vadd.f32 %v714, %v752
        %v769 = vadd.f32 %v715, %v753
        %v770 = vadd.f32 %v716, %v754
        %v771 = vadd.f32 %v717, %v755
        %v772 = vadd.f32 %v718, %v756
        %v773 = vadd.f32 %v719, %v757
        %v774 = vadd.f32 %v720, %v758
        %v775 = vadd.f32 %v721, %v759
        %v776 = vadd.f32 %v722, %v760
        %v777 = vadd.f32 %v723, %v761
        %v778 = vadd.f32 %v724, %v762
        %v779 = vld [vmem:[#allocation8 + $0x4] sm:$0x1]
        %v780 = vperm.slane %v779, 0
        %v781 = vmul.f32 %v727, %v780
        %v782 = vmul.f32 %v728, %v780
        %v783 = vmul.f32 %v729, %v780
        %v784 = vmul.f32 %v730, %v780
        %v785 = vmul.f32 %v731, %v780
        %v786 = vmul.f32 %v732, %v780
        %v787 = vmul.f32 %v733, %v780
        %v788 = vmul.f32 %v734, %v780
        %v789 = vmul.f32 %v735, %v780
        %v790 = vmul.f32 %v736, %v780
        %v791 = vmul.f32 %v737, %v780
        %v792 = vmul.f32 %v738, %v780
        %v793 = vmul.f32 %v739, %v780
        %v794 = vmul.f32 %v740, %v780
        %v795 = vmul.f32 %v741, %v780
        %v796 = vmul.f32 %v742, %v780
        %v797 = vadd.f32 %v763, %v781
        %v798 = vadd.f32 %v764, %v782
        %v799 = vadd.f32 %v765, %v783
        %v800 = vadd.f32 %v766, %v784
        %v801 = vadd.f32 %v767, %v785
        %v802 = vadd.f32 %v768, %v786
        %v803 = vadd.f32 %v769, %v787
        %v804 = vadd.f32 %v770, %v788
        %v805 = vadd.f32 %v771, %v789
        %v806 = vadd.f32 %v772, %v790
        %v807 = vadd.f32 %v773, %v791
        %v808 = vadd.f32 %v774, %v792
        %v809 = vadd.f32 %v775, %v793
        %v810 = vadd.f32 %v776, %v794
        %v811 = vadd.f32 %v777, %v795
        %v812 = vadd.f32 %v778, %v796
        %v813 = vld [vmem:[#allocation8 + $0x7] sm:$0x1]
        %v814 = vperm.slane %v813, 0
        %v815 = vmul.f32 %v729, %v814
        %v816 = vmul.f32 %v730, %v814
        %v817 = vmul.f32 %v731, %v814
        %v818 = vmul.f32 %v732, %v814
        %v819 = vmul.f32 %v733, %v814
        %v820 = vmul.f32 %v734, %v814
        %v821 = vmul.f32 %v735, %v814
        %v822 = vmul.f32 %v736, %v814
        %v823 = vmul.f32 %v737, %v814
        %v824 = vmul.f32 %v738, %v814
        %v825 = vmul.f32 %v739, %v814
        %v826 = vmul.f32 %v740, %v814
        %v827 = vmul.f32 %v741, %v814
        %v828 = vmul.f32 %v742, %v814
        %v829 = vmul.f32 %v743, %v814
        %v830 = vmul.f32 %v744, %v814
        %v831 = vadd.f32 %v797, %v815
        %v832 = vadd.f32 %v798, %v816
        %v833 = vadd.f32 %v799, %v817
        %v834 = vadd.f32 %v800, %v818
        %v835 = vadd.f32 %v801, %v819
        %v836 = vadd.f32 %v802, %v820
        %v837 = vadd.f32 %v803, %v821
        %v838 = vadd.f32 %v804, %v822
        %v839 = vadd.f32 %v805, %v823
        %v840 = vadd.f32 %v806, %v824
        %v841 = vadd.f32 %v807, %v825
        %v842 = vadd.f32 %v808, %v826
        %v843 = vadd.f32 %v809, %v827
        %v844 = vadd.f32 %v810, %v828
        %v845 = vadd.f32 %v811, %v829
        %v846 = vadd.f32 %v812, %v830
        %v847 = vld [vmem:[#allocation2 + $0x9] sm:$0xff]
        %v848 = vld [vmem:[#allocation2 + $0x11] sm:$0xff]
        %v849 = vld [vmem:[#allocation2 + $0x29] sm:$0xff]
        %v850 = vld [vmem:[#allocation2 + $0x31] sm:$0xff]
        %v851 = vld [vmem:[#allocation2 + $0x49] sm:$0xff]
        %v852 = vld [vmem:[#allocation2 + $0x51] sm:$0xff]
        %v853 = vld [vmem:[#allocation2 + $0x69] sm:$0xff]
        %v854 = vld [vmem:[#allocation2 + $0x71] sm:$0xff]
        %v855 = vld [vmem:[#allocation2 + $0x89] sm:$0xff]
        %v856 = vld [vmem:[#allocation2 + $0x91] sm:$0xff]
        %v857 = vld [vmem:[#allocation2 + $0xa9] sm:$0xff]
        %v858 = vld [vmem:[#allocation2 + $0xb1] sm:$0xff]
        %v859 = vld [vmem:[#allocation2 + $0xc9] sm:$0xff]
        %v860 = vld [vmem:[#allocation2 + $0xd1] sm:$0xff]
        %v861 = vld [vmem:[#allocation2 + $0xe9] sm:$0xff]
        %v862 = vld [vmem:[#allocation2 + $0xf1] sm:$0xff]
        %v863 = vld [vmem:[#allocation2 + $0x109] sm:$0xff]
        %v864 = vld [vmem:[#allocation2 + $0x111] sm:$0xff]
        %v865 = vld [vmem:[#allocation2 + $0x129] sm:$0xff]
        %v866 = vld [vmem:[#allocation2 + $0x131] sm:$0xff]
        %v867 = vld [vmem:[#allocation8 + $0x2] sm:$0x1]
        %v868 = vperm.slane %v867, 0
        %v869 = vmul.f32 %v847, %v868
        %v870 = vmul.f32 %v848, %v868
        %v871 = vmul.f32 %v849, %v868
        %v872 = vmul.f32 %v850, %v868
        %v873 = vmul.f32 %v851, %v868
        %v874 = vmul.f32 %v852, %v868
        %v875 = vmul.f32 %v853, %v868
        %v876 = vmul.f32 %v854, %v868
        %v877 = vmul.f32 %v855, %v868
        %v878 = vmul.f32 %v856, %v868
        %v879 = vmul.f32 %v857, %v868
        %v880 = vmul.f32 %v858, %v868
        %v881 = vmul.f32 %v859, %v868
        %v882 = vmul.f32 %v860, %v868
        %v883 = vmul.f32 %v861, %v868
        %v884 = vmul.f32 %v862, %v868
        %v885 = vadd.f32 %v831, %v869
        %v886 = vadd.f32 %v832, %v870
        %v887 = vadd.f32 %v833, %v871
        %v888 = vadd.f32 %v834, %v872
        %v889 = vadd.f32 %v835, %v873
        %v890 = vadd.f32 %v836, %v874
        %v891 = vadd.f32 %v837, %v875
        %v892 = vadd.f32 %v838, %v876
        %v893 = vadd.f32 %v839, %v877
        %v894 = vadd.f32 %v840, %v878
        %v895 = vadd.f32 %v841, %v879
        %v896 = vadd.f32 %v842, %v880
        %v897 = vadd.f32 %v843, %v881
        %v898 = vadd.f32 %v844, %v882
        %v899 = vadd.f32 %v845, %v883
        %v900 = vadd.f32 %v846, %v884
        %v901 = vld [vmem:[#allocation8 + $0x5] sm:$0x1]
        %v902 = vperm.slane %v901, 0
        %v903 = vmul.f32 %v849, %v902
        %v904 = vmul.f32 %v850, %v902
        %v905 = vmul.f32 %v851, %v902
        %v906 = vmul.f32 %v852, %v902
        %v907 = vmul.f32 %v853, %v902
        %v908 = vmul.f32 %v854, %v902
        %v909 = vmul.f32 %v855, %v902
        %v910 = vmul.f32 %v856, %v902
        %v911 = vmul.f32 %v857, %v902
        %v912 = vmul.f32 %v858, %v902
        %v913 = vmul.f32 %v859, %v902
        %v914 = vmul.f32 %v860, %v902
        %v915 = vmul.f32 %v861, %v902
        %v916 = vmul.f32 %v862, %v902
        %v917 = vmul.f32 %v863, %v902
        %v918 = vmul.f32 %v864, %v902
        %v919 = vadd.f32 %v885, %v903
        %v920 = vadd.f32 %v886, %v904
        %v921 = vadd.f32 %v887, %v905
        %v922 = vadd.f32 %v888, %v906
        %v923 = vadd.f32 %v889, %v907
        %v924 = vadd.f32 %v890, %v908
        %v925 = vadd.f32 %v891, %v909
        %v926 = vadd.f32 %v892, %v910
        %v927 = vadd.f32 %v893, %v911
        %v928 = vadd.f32 %v894, %v912
        %v929 = vadd.f32 %v895, %v913
        %v930 = vadd.f32 %v896, %v914
        %v931 = vadd.f32 %v897, %v915
        %v932 = vadd.f32 %v898, %v916
        %v933 = vadd.f32 %v899, %v917
        %v934 = vadd.f32 %v900, %v918
        %v935 = vld [vmem:[#allocation8 + $0x8] sm:$0x1]
        %v936 = vperm.slane %v935, 0
        %v937 = vmul.f32 %v851, %v936
        %v938 = vmul.f32 %v852, %v936
        %v939 = vmul.f32 %v853, %v936
        %v940 = vmul.f32 %v854, %v936
        %v941 = vmul.f32 %v855, %v936
        %v942 = vmul.f32 %v856, %v936
        %v943 = vmul.f32 %v857, %v936
        %v944 = vmul.f32 %v858, %v936
        %v945 = vmul.f32 %v859, %v936
        %v946 = vmul.f32 %v860, %v936
        %v947 = vmul.f32 %v861, %v936
        %v948 = vmul.f32 %v862, %v936
        %v949 = vmul.f32 %v863, %v936
        %v950 = vmul.f32 %v864, %v936
        %v951 = vmul.f32 %v865, %v936
        %v952 = vmul.f32 %v866, %v936
        %v953 = vadd.f32 %v919, %v937
        %v954 = vadd.f32 %v920, %v938
        %v955 = vadd.f32 %v921, %v939
        %v956 = vadd.f32 %v922, %v940
        %v957 = vadd.f32 %v923, %v941
        %v958 = vadd.f32 %v924, %v942
        %v959 = vadd.f32 %v925, %v943
        %v960 = vadd.f32 %v926, %v944
        %v961 = vadd.f32 %v927, %v945
        %v962 = vadd.f32 %v928, %v946
        %v963 = vadd.f32 %v929, %v947
        %v964 = vadd.f32 %v930, %v948
        %v965 = vadd.f32 %v931, %v949
        %v966 = vadd.f32 %v932, %v950
        %v967 = vadd.f32 %v933, %v951
        %v968 = vadd.f32 %v934, %v952
        %v969 = vld [vmem:[#allocation9] sm:$0xff]
        %v970 = vld [vmem:[#allocation9 + $0x8] sm:$0xff]
        %v971 = vld [vmem:[#allocation9 + $0x10] sm:$0xff]
        %v972 = vld [vmem:[#allocation9 + $0x18] sm:$0xff]
        %v973 = vld [vmem:[%s5] sm:$0x1]
        %v975 = vperm.slane %v973, 0
        %v978 = vsel %vm364, %v953, 0
        %v981 = vsel %vm364, %v954, 0
        %v984 = vsel %vm364, %v955, 0
        %v987 = vsel %vm364, %v956, 0
        %v990 = vsel %vm364, %v957, 0
        %v993 = vsel %vm364, %v958, 0
        %v996 = vsel %vm364, %v959, 0
        %v999 = vsel %vm364, %v960, 0
        %v1002 = vsel %vm364, %v961, 0
        %v1005 = vsel %vm364, %v962, 0
        %v1008 = vsel %vm364, %v963, 0
        %v1011 = vsel %vm364, %v964, 0
        %v1014 = vsel %vm364, %v965, 0
        %v1017 = vsel %vm364, %v966, 0
        %v1020 = vsel %vm364, %v967, 0
        %v1023 = vsel %vm364, %v968, 0
        %1025 = vmatpush.msra.mxu0 0.0
        %1026 = vmatpush.msra.mxu0 0.0
        %1027 = vmatpush.msra.mxu0 0.0
        %1028 = vmatpush.msra.mxu0 0.0
        %1029 = vmatpush.msra.mxu0 0.0
        %1030 = vmatpush.msra.mxu0 0.0
        %1031 = vmatpush.msra.mxu0 0.0
        %1032 = vmatpush.msra.mxu0 0.0
        %1033 = vmatpush.msra.mxu0 0.0
        %1034 = vmatpush.msra.mxu0 0.0
        %1035 = vmatpush.msra.mxu0 0.0
        %1036 = vmatpush.msra.mxu0 0.0
        %1037 = vmatpush.msra.mxu0 %v972
        %1038 = vmatpush.msra.mxu0 %v971
        %1039 = vmatpush.msra.mxu0 %v970
        %1040 = vmatpush.msra.mxu0 %v969
        %1041 = vmatmul.f32.gmra.mxu0 %v978
        %v1042 = vpop.f32.mrf.mxu0
        %v1043 = vadd.f32 %v975, %v1042
        %1044 = vmatmul.f32.gmra.mxu0 %v981
        %v1045 = vpop.f32.mrf.mxu0
        %v1046 = vadd.f32 %v975, %v1045
        %1047 = vmatmul.f32.gmra.mxu0 %v984
        %v1048 = vpop.f32.mrf.mxu0
        %v1049 = vadd.f32 %v975, %v1048
        %1050 = vmatmul.f32.gmra.mxu0 %v987
        %v1051 = vpop.f32.mrf.mxu0
        %v1052 = vadd.f32 %v975, %v1051
        %1053 = vmatmul.f32.gmra.mxu0 %v990
        %v1054 = vpop.f32.mrf.mxu0
        %v1055 = vadd.f32 %v975, %v1054
        %1056 = vmatmul.f32.gmra.mxu0 %v993
        %v1057 = vpop.f32.mrf.mxu0
        %v1058 = vadd.f32 %v975, %v1057
        %1059 = vmatmul.f32.gmra.mxu0 %v996
        %v1060 = vpop.f32.mrf.mxu0
        %v1061 = vadd.f32 %v975, %v1060
        %1062 = vmatmul.f32.gmra.mxu0 %v999
        %v1063 = vpop.f32.mrf.mxu0
        %v1064 = vadd.f32 %v975, %v1063
        %1065 = vmatmul.f32.gmra.mxu0 %v1002
        %v1066 = vpop.f32.mrf.mxu0
        %v1067 = vadd.f32 %v975, %v1066
        %1068 = vmatmul.f32.gmra.mxu0 %v1005
        %v1069 = vpop.f32.mrf.mxu0
        %v1070 = vadd.f32 %v975, %v1069
        %1071 = vmatmul.f32.gmra.mxu0 %v1008
        %v1072 = vpop.f32.mrf.mxu0
        %v1073 = vadd.f32 %v975, %v1072
        %1074 = vmatmul.f32.gmra.mxu0 %v1011
        %v1075 = vpop.f32.mrf.mxu0
        %v1076 = vadd.f32 %v975, %v1075
        %1077 = vmatmul.f32.gmra.mxu0 %v1014
        %v1078 = vpop.f32.mrf.mxu0
        %v1079 = vadd.f32 %v975, %v1078
        %1080 = vmatmul.f32.gmra.mxu0 %v1017
        %v1081 = vpop.f32.mrf.mxu0
        %v1082 = vadd.f32 %v975, %v1081
        %1083 = vmatmul.f32.gmra.mxu0 %v1020
        %v1084 = vpop.f32.mrf.mxu0
        %v1085 = vadd.f32 %v975, %v1084
        %1086 = vmatmul.f32.gmra.mxu0 %v1023
        %v1087 = vpop.f32.mrf.mxu0
        %v1088 = vadd.f32 %v975, %v1087
        %1089 = vdwg.mxu0
        %1090 = vst.msk [vmem:[%s335] sm:$0xff] %vm364, %v1043
        %1091 = vst.msk [vmem:[%s335 + $0x8] sm:$0xff] %vm364, %v1046
        %1092 = vst.msk [vmem:[%s335 + $0x10] sm:$0xff] %vm364, %v1049
        %1093 = vst.msk [vmem:[%s335 + $0x18] sm:$0xff] %vm364, %v1052
        %1094 = vst.msk [vmem:[%s335 + $0x20] sm:$0xff] %vm364, %v1055
        %1095 = vst.msk [vmem:[%s335 + $0x28] sm:$0xff] %vm364, %v1058
        %1096 = vst.msk [vmem:[%s335 + $0x30] sm:$0xff] %vm364, %v1061
        %1097 = vst.msk [vmem:[%s335 + $0x38] sm:$0xff] %vm364, %v1064
        %1098 = vst.msk [vmem:[%s335 + $0x40] sm:$0xff] %vm364, %v1067
        %1099 = vst.msk [vmem:[%s335 + $0x48] sm:$0xff] %vm364, %v1070
        %1100 = vst.msk [vmem:[%s335 + $0x50] sm:$0xff] %vm364, %v1073
        %1101 = vst.msk [vmem:[%s335 + $0x58] sm:$0xff] %vm364, %v1076
        %1102 = vst.msk [vmem:[%s335 + $0x60] sm:$0xff] %vm364, %v1079
        %1103 = vst.msk [vmem:[%s335 + $0x68] sm:$0xff] %vm364, %v1082
        %1104 = vst.msk [vmem:[%s335 + $0x70] sm:$0xff] %vm364, %v1085
        %1105 = vst.msk [vmem:[%s335 + $0x78] sm:$0xff] %vm364, %v1088
        %s1106 = sand.u32 %s178, 1
        %s1107 = scalar_lea.sflag [#allocation5], %s1106
        %s1108 = sand.u32 %s178, 1
        %s1109 = smul.addr %s1108, 128
        %s1110 = scalar_lea.vmem [#allocation11], %s1109
        // Predicated region
        $region61: #{local_agg.1} parent=43 // pred_check
          %p1111 = pneg %p188
        $region62: #{local_agg.1} parent=43 // pred_check_branch
          %1113 = sbr.rel (%p1111) target = $region64
        $region63: #{local_agg.1} parent=43 // pred_region
          %s1114 = smul.u32 8, %s30
          %1116 = vsyncadd %s1107, 0
          %s1117 = smul.addr %s1114, 2
          %s1118 = smul.addr %s29, 32
          %s1119 = sadd.s32 %s1117, %s1118
          %s1120 = smul.addr %s1119, 8
          %s1121 = scalar_lea.hbm %s6, %s1120
          %s1122 = sshll.u32 %s1110, 4
          %s1123 = int_to_ptr.vmem [resolvable:$true] %s1122
          %s1124 = sshll.u32 %s1121, 4
          %s1125 = int_to_ptr.hbm [resolvable:$true] %s1124
          %1130 = dma.vmem_to_hbm [thread:$0]  %s1123, 2048, %s1125, %s1107, 128, 128, 8
        $region64: #{local_agg.1} parent=43 // pred_fallthru
          _
      $region44: #{local_agg.1} parent=5 // pred_fallthru
        _
      %p1131 = scmp.le.s32.totalorder 2, %s20
      // Predicated region
      $region65: #{local_agg.1} parent=5 // pred_check
        %p1132 = pneg %p1131
      $region66: #{local_agg.1} parent=5 // pred_check_branch
        %1134 = sbr.rel (%p1132) target = $region68
      $region67: #{local_agg.1} parent=5 // pred_region
        %s1135 = ssub.s32 %s20, 2
        // Predicated region
        $region69: #{local_agg.1} parent=67 // pred_check
          %p1136 = pneg %p194
        $region70: #{local_agg.1} parent=67 // pred_check_branch
          %1138 = sbr.rel (%p1136) target = $region72
        $region71: #{local_agg.1} parent=67 // pred_region
          %s1139 = sand.u32 %s179, 1
          %s1140 = scalar_lea.sflag [#allocation5], %s1139
          %s1141 = sand.u32 %s179, 1
          %s1142 = smul.addr %s1141, 128
          %s1143 = scalar_lea.vmem [#allocation11], %s1142
          %1145 = dma.done %s1140, 2048
        $region72: #{local_agg.1} parent=67 // pred_fallthru
          _
      $region68: #{local_agg.1} parent=5 // pred_fallthru
        _
    $region6: #{local_agg.1} parent=1 // loop_footer
      %s24 = sadd.s32 1, %s20
    $region7: #{local_agg.1} parent=1 // loop_footer_branch
      %19 = sbr.rel target = $region3
    $region8: #{local_agg.1} parent=1 // loop_exit
      _
    %1146 = vsyncpa [#allocation4], 1
    %s1147 = scalar_lea.sflag [#allocation4], 1
    %1148 = vsyncpa %s1147, 1
    %1149 = vsyncpa [#allocation7], 1
    %1150 = vsyncpa [#allocation10], 1
    %1151 = vsyncpa [#allocation5], 1
    %s1152 = scalar_lea.sflag [#allocation5], 1
    %1153 = vsyncpa %s1152, 1

</llo_original>
